<compile_context>
chip_gen: v7x
topology: tpu7x:2x2x1
jax: 0.10.0
libtpu: 0.0.40
codegen_flags: <defaults>
</compile_context>

<pallas_src>
import functools
import numpy as np
import jax
import jax.numpy as jnp
from jax.experimental import pallas as pl
from jax.experimental.pallas import tpu as pltpu

F32 = jnp.float32
BF16 = jnp.bfloat16
LANES = 128

# NAS-Bench-201 search space op names (len == num_ops == 5).
OP_NAMES = ('none', 'skip_connect', 'nor_conv_1x1', 'nor_conv_3x3', 'avg_pool_3x3')


# ------------------------- Pallas kernel (whole forward) -------------------------

def _controller_kernel(wslab_ref, fslab_ref, out_ref,
                       *, num_edge, num_ops, hidden, temperature, tanh_constant):
    H = hidden                                     # 32  -> 4H = 128 (one lane-dense vreg row)
    NEG = jnp.float32(-1e30)

    # ---- bf16 weight slab: [W1 (2H,4H) ; Whh0 (H,4H) ; Wpred_padded (H,128)] ----
    wslab = wslab_ref[...]                         # (128, 128) bf16
    W1 = wslab[0:2 * H, :]                         # [wih1; whh1]    (64, 128)
    Whh0 = wslab[2 * H:3 * H, :]                   # (32, 128)
    Wpred = wslab[3 * H:4 * H, :]                  # (32, 128), lanes >= num_ops are 0

    # ---- f32 slab: biases / folded-embedding table / gumbel noise ----
    fslab = fslab_ref[...]                         # (24, 128) f32
    x0b = fslab[0:1, :]                            # input_vars @ wih0 + b0      (1, 128)
    b1 = fslab[1:2, :]                             # b_ih_l1 + b_hh_l1           (1, 128)
    bpred = fslab[2:3, :]                          # padded pred bias            (1, 128)
    table0b = fslab[8:8 + num_ops, :]              # wembd @ wih0 + b0           (5, 128)
    gumbel = fslab[16:16 + num_edge, :]            # gumbel noise (padded lanes) (6, 128)

    lane_i32 = jax.lax.broadcasted_iota(jnp.int32, (1, LANES), 1)
    valid_ops = lane_i32 < num_ops                 # (1, 128) bool
    ops_row = jax.lax.broadcasted_iota(jnp.int32, (num_ops, 1), 0)   # (5, 1)

    def lstm_cell_from_gates(gates, c):
        # gates: (1, 4H) f32, PyTorch nn.LSTM order [i, f, g, o].
        # Whole-vreg transcendentals (EUP cost is per-push, not per-lane).
        sig = jax.nn.sigmoid(gates)
        th = jnp.tanh(gates)
        i = sig[:, 0 * H:1 * H]
        f = sig[:, 1 * H:2 * H]
        g = th[:, 2 * H:3 * H]
        o = sig[:, 3 * H:4 * H]
        c_new = f * c + i * g
        h_new = o * jnp.tanh(c_new)
        return h_new, c_new

    h0 = jnp.zeros((1, H), F32); c0 = jnp.zeros((1, H), F32)   # h0=None -> zeros
    h1 = jnp.zeros((1, H), F32); c1 = jnp.zeros((1, H), F32)

    lp_sum = jnp.zeros((1, 1), F32)
    ent_sum = jnp.zeros((1, 1), F32)
    result = jnp.zeros((1, LANES), F32)

    # Step-0 layer-0 input contribution (bias b0 already folded in on the host).
    in_gates = x0b
    inv_temp = jnp.float32(1.0 / temperature)

    # num_edge == 6 -> fully unrolled; all state stays in vregs, no HBM traffic.
    for step in range(num_edge):
        # ---- LSTM layer 0: gates = (x @ wih0 + b0)[precomputed] + h0 @ whh0 ----
        g0 = in_gates + jnp.dot(h0.astype(BF16), Whh0, preferred_element_type=F32)
        h0, c0 = lstm_cell_from_gates(g0, c0)

        # ---- LSTM layer 1: fused concat([h0, h1]) @ [wih1; whh1] + b1 ----
        xh = jnp.concatenate([h0, h1], axis=1).astype(BF16)       # (1, 2H)
        g1 = jnp.dot(xh, W1, preferred_element_type=F32) + b1
        h1, c1 = lstm_cell_from_gates(g1, c1)

        # ---- Prediction head (padded to 128 lanes; mask pad lanes to -1e30) ----
        logits = jnp.dot(h1.astype(BF16), Wpred, preferred_element_type=F32) + bpred
        logits = tanh_constant * jnp.tanh(logits * inv_temp)
        logits = jnp.where(valid_ops, logits, NEG)                 # (1, 128)

        # ---- Categorical(logits): log-softmax + entropy ----
        m = jnp.max(logits, axis=-1, keepdims=True)
        z = logits - m
        ez = jnp.exp(z)                                            # pad lanes -> 0
        s = jnp.sum(ez, axis=-1, keepdims=True)
        logp = z - jnp.log(s)
        p = ez * pl.reciprocal(s, approx=True)                     # reuse exp(z)
        ent_sum = ent_sum - jnp.sum(jnp.where(valid_ops, p * logp, 0.0),
                                    axis=-1, keepdims=True)

        # ---- Gumbel-max sample (== Categorical.sample distributionally) ----
        vals = logits + gumbel[step:step + 1, :]
        vmax = jnp.max(vals, axis=-1, keepdims=True)
        idx = jnp.min(jnp.where(vals >= vmax, lane_i32, LANES),
                      axis=-1, keepdims=True)                      # (1, 1) int32
        onehot = (lane_i32 == idx).astype(F32)                     # (1, 128)

        lp_sum = lp_sum + jnp.sum(onehot * logp, axis=-1, keepdims=True)
        result = result + idx.astype(F32) * (lane_i32 == (2 + step)).astype(F32)

        # ---- Next layer-0 input gates: embedding folded through wih0 (+ b0),
        #      selected on the VPU + one sublane reduce (no MXU push) ----
        in_gates = jnp.sum(jnp.where(ops_row == idx, table0b, 0.0),
                           axis=0, keepdims=True)                  # (1, 128)

    # Single lane-dense (1,128) store: lane0=log_prob, lane1=entropy, lanes 2..7=arch.
    result = (result
              + lp_sum * (lane_i32 == 0).astype(F32)
              + ent_sum * (lane_i32 == 1).astype(F32))
    out_ref[...] = result


def controller_forward(wslab, fslab, *, num_edge, num_ops, hidden,
                       temperature, tanh_constant):
    kern = functools.partial(
        _controller_kernel, num_edge=num_edge, num_ops=num_ops, hidden=hidden,
        temperature=temperature, tanh_constant=tanh_constant)
    vmem = lambda: pl.BlockSpec(memory_space=pltpu.MemorySpace.VMEM)
    out = pl.pallas_call(
        kern,
        out_shape=jax.ShapeDtypeStruct((1, LANES), F32),
        in_specs=[vmem(), vmem()],
        out_specs=vmem(),
    )(wslab, fslab)
    lp = out[0, 0]
    ent = out[0, 1]
    arch = out[0, 2:2 + num_edge].astype(jnp.int32)
    return lp, ent, arch


# ------------------------- host-side helpers -------------------------

def init_controller(key, lstm_size=32, max_nodes=4, num_ops=5):
    """Deterministic synthetic parameters mirroring the PyTorch uniform(-0.1, 0.1) init."""
    edge2index, idx = {}, 0
    for i in range(1, max_nodes):
        for j in range(i):
            edge2index['{:}<-{:}'.format(i, j)] = idx
            idx += 1
    num_edge = idx

    def unif(k, shape):
        return jax.random.uniform(k, shape, F32, minval=-0.1, maxval=0.1)

    ks = jax.random.split(key, 10)
    H = lstm_size
    params = {
        'input_vars': unif(ks[0], (1, H)),
        # nn.LSTM weights, pre-transposed to (in, 4H) so the kernel does x @ W.
        'wih0': unif(ks[1], (H, 4 * H)),
        'whh0': unif(ks[2], (H, 4 * H)),
        'b0':   unif(ks[3], (1, 4 * H)),       # b_ih_l0 + b_hh_l0 folded
        'wih1': unif(ks[4], (H, 4 * H)),
        'whh1': unif(ks[5], (H, 4 * H)),
        'b1':   unif(ks[6], (1, 4 * H)),       # b_ih_l1 + b_hh_l1 folded
        'wembd': unif(ks[7], (num_ops, H)),    # nn.Embedding(num_ops, H)
        'wpred': unif(ks[8], (H, num_ops)),    # nn.Linear(H, num_ops), transposed
        'bpred': unif(ks[9], (1, num_ops)),
    }
    meta = {'edge2index': edge2index, 'num_edge': num_edge, 'max_nodes': max_nodes,
            'num_ops': num_ops, 'lstm_size': H}
    return params, meta


def pack_slabs(params, gumbel, *, num_edge, num_ops, hidden):
    """Pack all parameters + noise into two lane-dense slabs (2 input DMAs total)."""
    H = hidden
    # bf16 MXU-operand slab: rows [0:2H) = [wih1; whh1], [2H:3H) = whh0,
    # [3H:4H) = wpred padded to 128 output lanes with zeros.
    W1 = jnp.concatenate([params['wih1'], params['whh1']], axis=0)          # (64, 128)
    wpred_pad = jnp.zeros((H, LANES), F32).at[:, :num_ops].set(params['wpred'])
    wslab = jnp.concatenate([W1, params['whh0'], wpred_pad], axis=0).astype(BF16)  # (128,128)

    # f32 slab: precomputed input gates (bias folded), biases, folded embedding
    # table, gumbel noise — all already lane-padded to 128.
    x0b = params['input_vars'] @ params['wih0'] + params['b0']              # (1, 128)
    table0b = params['wembd'] @ params['wih0'] + params['b0']               # (5, 128)
    bpred_pad = jnp.zeros((1, LANES), F32).at[:, :num_ops].set(params['bpred'])
    gumbel_pad = jnp.zeros((num_edge, LANES), F32).at[:, :num_ops].set(gumbel)

    fslab = jnp.zeros((24, LANES), F32)
    fslab = fslab.at[0:1].set(x0b)
    fslab = fslab.at[1:2].set(params['b1'])
    fslab = fslab.at[2:3].set(bpred_pad)
    fslab = fslab.at[8:8 + num_ops].set(table0b)
    fslab = fslab.at[16:16 + num_edge].set(gumbel_pad)
    return wslab, fslab


def convert_structure(sampled_arch, edge2index, op_names, max_nodes):
    genotypes = []
    for i in range(1, max_nodes):
        xlist = []
        for j in range(i):
            node_str = '{:}<-{:}'.format(i, j)
            op_index = int(sampled_arch[edge2index[node_str]])
            xlist.append((op_names[op_index], j))
        genotypes.append(tuple(xlist))
    return tuple(genotypes)   # TODO(synk): Structure wrapper class not ported


# ------------------------- main -------------------------

if __name__ == "__main__":
    key = jax.random.PRNGKey(0)
    pkey, gkey = jax.random.split(key)

    LSTM_SIZE, MAX_NODES = 32, 4
    TEMPERATURE, TANH_CONST = 5.0, 2.5
    params, meta = init_controller(pkey, lstm_size=LSTM_SIZE, max_nodes=MAX_NODES,
                                   num_ops=len(OP_NAMES))
    num_edge, num_ops = meta['num_edge'], meta['num_ops']

    # Deterministic Gumbel noise for the per-edge categorical samples.
    u = jax.random.uniform(gkey, (num_edge, num_ops), F32,
                           minval=1e-6, maxval=1.0 - 1e-6)
    gumbel = -jnp.log(-jnp.log(u))

    # One-time host-side packing (in a real ENAS loop this is cached per step).
    wslab, fslab = pack_slabs(params, gumbel, num_edge=num_edge,
                              num_ops=num_ops, hidden=LSTM_SIZE)

    fwd = jax.jit(functools.partial(
        controller_forward, num_edge=num_edge, num_ops=num_ops,
        hidden=LSTM_SIZE, temperature=TEMPERATURE, tanh_constant=TANH_CONST))

    sum_log_prob, sum_entropy, sampled_arch = fwd(wslab, fslab)
    jax.block_until_ready((sum_log_prob, sum_entropy, sampled_arch))

    arch_np = np.asarray(sampled_arch)
    genotype = convert_structure(arch_np, meta['edge2index'], OP_NAMES, meta['max_nodes'])

    assert arch_np.shape == (num_edge,)
    assert np.all(arch_np >= 0) and np.all(arch_np < num_ops)
    assert np.isfinite(float(sum_log_prob)) and float(sum_log_prob) <= 0.0
    assert np.isfinite(float(sum_entropy))
    assert 0.0 < float(sum_entropy) <= num_edge * np.log(num_ops) + 1e-4
    assert len(genotype) == MAX_NODES - 1 and len(genotype[-1]) == MAX_NODES - 1
    print("KERNEL_OK")
</pallas_src>

<mosaic_0001>
module attributes {stable_mosaic.version = 11 : i64} {
  func.func @_controller_kernel(%arg0: memref<128x128xbf16, #tpu.memory_space<vmem>>, %arg1: memref<24x128xf32, #tpu.memory_space<vmem>>, %arg2: memref<1x128xf32, #tpu.memory_space<vmem>>) attributes {dimension_semantics = [], scalar_prefetch = 0 : i64, scratch_operands = 0 : i64, tpu.core_type = #tpu.core_type<tc>} {
    %c0 = arith.constant 0 : index
    %c0_0 = arith.constant 0 : index
    %0 = vector.load %arg0[%c0, %c0_0] : memref<128x128xbf16, #tpu.memory_space<vmem>>, vector<128x128xbf16>
    %1 = vector.extract_strided_slice %0 {offsets = [0, 0], sizes = [64, 128], strides = [1, 1]} : vector<128x128xbf16> to vector<64x128xbf16>
    %2 = vector.extract_strided_slice %0 {offsets = [64, 0], sizes = [32, 128], strides = [1, 1]} : vector<128x128xbf16> to vector<32x128xbf16>
    %3 = vector.extract_strided_slice %0 {offsets = [96, 0], sizes = [32, 128], strides = [1, 1]} : vector<128x128xbf16> to vector<32x128xbf16>
    %c0_1 = arith.constant 0 : index
    %c0_2 = arith.constant 0 : index
    %4 = vector.load %arg1[%c0_1, %c0_2] : memref<24x128xf32, #tpu.memory_space<vmem>>, vector<24x128xf32>
    %5 = vector.extract_strided_slice %4 {offsets = [0, 0], sizes = [1, 128], strides = [1, 1]} : vector<24x128xf32> to vector<1x128xf32>
    %6 = vector.extract_strided_slice %4 {offsets = [1, 0], sizes = [1, 128], strides = [1, 1]} : vector<24x128xf32> to vector<1x128xf32>
    %7 = vector.extract_strided_slice %4 {offsets = [2, 0], sizes = [1, 128], strides = [1, 1]} : vector<24x128xf32> to vector<1x128xf32>
    %8 = vector.extract_strided_slice %4 {offsets = [8, 0], sizes = [5, 128], strides = [1, 1]} : vector<24x128xf32> to vector<5x128xf32>
    %9 = vector.extract_strided_slice %4 {offsets = [16, 0], sizes = [6, 128], strides = [1, 1]} : vector<24x128xf32> to vector<6x128xf32>
    %10 = tpu.iota {dimensions = array<i32: 1>} : vector<1x128xi32>
    %c5_i32 = arith.constant 5 : i32
    %11 = vector.broadcast %c5_i32 : i32 to vector<1x128xi32>
    %12 = arith.cmpi slt, %10, %11 : vector<1x128xi32>
    %13 = tpu.iota {dimensions = array<i32: 0>} : vector<5x1xi32>
    %cst = arith.constant 0.000000e+00 : f32
    %14 = vector.broadcast %cst : f32 to vector<1x32xf32>
    %cst_3 = arith.constant 0.000000e+00 : f32
    %15 = vector.broadcast %cst_3 : f32 to vector<1x32xf32>
    %cst_4 = arith.constant 0.000000e+00 : f32
    %16 = vector.broadcast %cst_4 : f32 to vector<1x32xf32>
    %cst_5 = arith.constant 0.000000e+00 : f32
    %17 = vector.broadcast %cst_5 : f32 to vector<1x32xf32>
    %cst_6 = arith.constant 0.000000e+00 : f32
    %18 = vector.broadcast %cst_6 : f32 to vector<1x1xf32>
    %cst_7 = arith.constant 0.000000e+00 : f32
    %19 = vector.broadcast %cst_7 : f32 to vector<1x1xf32>
    %cst_8 = arith.constant 0.000000e+00 : f32
    %20 = vector.broadcast %cst_8 : f32 to vector<1x128xf32>
    %21 = arith.truncf %14 : vector<1x32xf32> to vector<1x32xbf16>
    %cst_9 = arith.constant dense<0.000000e+00> : vector<1x128xf32>
    %22 = tpu.matmul %21, %2, %cst_9 {dimension_numbers = #tpu.dot_dimension_numbers<[1], [0], [0], [1], [0, 0, 1, 1], [], []>} : vector<1x32xbf16>, vector<32x128xbf16>, vector<1x128xf32> -> vector<1x128xf32>
    %23 = arith.addf %5, %22 : vector<1x128xf32>
    %24 = arith.negf %23 : vector<1x128xf32>
    %25 = math.exp %24 : vector<1x128xf32>
    %cst_10 = arith.constant 1.000000e+00 : f32
    %26 = vector.broadcast %cst_10 : f32 to vector<1x128xf32>
    %27 = arith.addf %26, %25 : vector<1x128xf32>
    %28 = arith.divf %26, %27 : vector<1x128xf32>
    %29 = math.tanh %23 : vector<1x128xf32>
    %30 = vector.extract_strided_slice %28 {offsets = [0, 0], sizes = [1, 32], strides = [1, 1]} : vector<1x128xf32> to vector<1x32xf32>
    %31 = vector.extract_strided_slice %28 {offsets = [0, 32], sizes = [1, 32], strides = [1, 1]} : vector<1x128xf32> to vector<1x32xf32>
    %32 = vector.extract_strided_slice %29 {offsets = [0, 64], sizes = [1, 32], strides = [1, 1]} : vector<1x128xf32> to vector<1x32xf32>
    %33 = vector.extract_strided_slice %28 {offsets = [0, 96], sizes = [1, 32], strides = [1, 1]} : vector<1x128xf32> to vector<1x32xf32>
    %34 = arith.mulf %31, %15 : vector<1x32xf32>
    %35 = arith.mulf %30, %32 : vector<1x32xf32>
    %36 = arith.addf %34, %35 : vector<1x32xf32>
    %37 = math.tanh %36 : vector<1x32xf32>
    %38 = arith.mulf %33, %37 : vector<1x32xf32>
    %39 = tpu.concatenate %38, %16 in 1 : vector<1x32xf32>, vector<1x32xf32> -> vector<1x64xf32>
    %40 = arith.truncf %39 : vector<1x64xf32> to vector<1x64xbf16>
    %cst_11 = arith.constant dense<0.000000e+00> : vector<1x128xf32>
    %41 = tpu.matmul %40, %1, %cst_11 {dimension_numbers = #tpu.dot_dimension_numbers<[1], [0], [0], [1], [0, 0, 1, 1], [], []>} : vector<1x64xbf16>, vector<64x128xbf16>, vector<1x128xf32> -> vector<1x128xf32>
    %42 = arith.addf %41, %6 : vector<1x128xf32>
    %43 = arith.negf %42 : vector<1x128xf32>
    %44 = math.exp %43 : vector<1x128xf32>
    %cst_12 = arith.constant 1.000000e+00 : f32
    %45 = vector.broadcast %cst_12 : f32 to vector<1x128xf32>
    %46 = arith.addf %45, %44 : vector<1x128xf32>
    %47 = arith.divf %45, %46 : vector<1x128xf32>
    %48 = math.tanh %42 : vector<1x128xf32>
    %49 = vector.extract_strided_slice %47 {offsets = [0, 0], sizes = [1, 32], strides = [1, 1]} : vector<1x128xf32> to vector<1x32xf32>
    %50 = vector.extract_strided_slice %47 {offsets = [0, 32], sizes = [1, 32], strides = [1, 1]} : vector<1x128xf32> to vector<1x32xf32>
    %51 = vector.extract_strided_slice %48 {offsets = [0, 64], sizes = [1, 32], strides = [1, 1]} : vector<1x128xf32> to vector<1x32xf32>
    %52 = vector.extract_strided_slice %47 {offsets = [0, 96], sizes = [1, 32], strides = [1, 1]} : vector<1x128xf32> to vector<1x32xf32>
    %53 = arith.mulf %50, %17 : vector<1x32xf32>
    %54 = arith.mulf %49, %51 : vector<1x32xf32>
    %55 = arith.addf %53, %54 : vector<1x32xf32>
    %56 = math.tanh %55 : vector<1x32xf32>
    %57 = arith.mulf %52, %56 : vector<1x32xf32>
    %58 = arith.truncf %57 : vector<1x32xf32> to vector<1x32xbf16>
    %cst_13 = arith.constant dense<0.000000e+00> : vector<1x128xf32>
    %59 = tpu.matmul %58, %3, %cst_13 {dimension_numbers = #tpu.dot_dimension_numbers<[1], [0], [0], [1], [0, 0, 1, 1], [], []>} : vector<1x32xbf16>, vector<32x128xbf16>, vector<1x128xf32> -> vector<1x128xf32>
    %60 = arith.addf %59, %7 : vector<1x128xf32>
    %cst_14 = arith.constant 2.000000e-01 : f32
    %61 = vector.broadcast %cst_14 : f32 to vector<1x128xf32>
    %62 = arith.mulf %60, %61 : vector<1x128xf32>
    %63 = math.tanh %62 : vector<1x128xf32>
    %cst_15 = arith.constant 2.500000e+00 : f32
    %64 = vector.broadcast %cst_15 : f32 to vector<1x128xf32>
    %65 = arith.mulf %64, %63 : vector<1x128xf32>
    %cst_16 = arith.constant -1.000000e+30 : f32
    %66 = vector.broadcast %cst_16 : f32 to vector<1x128xf32>
    %67 = arith.select %12, %65, %66 : vector<1x128xi1>, vector<1x128xf32>
    %cst_17 = arith.constant dense<0xFF800000> : vector<1xf32>
    %68 = vector.multi_reduction <maximumf>, %67, %cst_17 [1] : vector<1x128xf32> to vector<1xf32>
    %69 = vector.shape_cast %68 : vector<1xf32> to vector<1x1xf32>
    %70 = vector.broadcast %69 : vector<1x1xf32> to vector<1x128xf32>
    %71 = arith.subf %67, %70 : vector<1x128xf32>
    %72 = math.exp %71 : vector<1x128xf32>
    %cst_18 = arith.constant dense<0.000000e+00> : vector<1xf32>
    %73 = vector.multi_reduction <add>, %72, %cst_18 [1] : vector<1x128xf32> to vector<1xf32>
    %74 = vector.shape_cast %73 : vector<1xf32> to vector<1x1xf32>
    %75 = math.log %74 : vector<1x1xf32>
    %76 = vector.broadcast %75 : vector<1x1xf32> to vector<1x128xf32>
    %77 = arith.subf %71, %76 : vector<1x128xf32>
    %78 = tpu.reciprocal %74 {approx = true} : vector<1x1xf32> -> vector<1x1xf32>
    %79 = vector.broadcast %78 : vector<1x1xf32> to vector<1x128xf32>
    %80 = arith.mulf %72, %79 : vector<1x128xf32>
    %81 = arith.mulf %80, %77 : vector<1x128xf32>
    %cst_19 = arith.constant 0.000000e+00 : f32
    %82 = vector.broadcast %cst_19 : f32 to vector<1x128xf32>
    %83 = arith.select %12, %81, %82 : vector<1x128xi1>, vector<1x128xf32>
    %cst_20 = arith.constant dense<0.000000e+00> : vector<1xf32>
    %84 = vector.multi_reduction <add>, %83, %cst_20 [1] : vector<1x128xf32> to vector<1xf32>
    %85 = vector.shape_cast %84 : vector<1xf32> to vector<1x1xf32>
    %86 = arith.subf %19, %85 : vector<1x1xf32>
    %87 = vector.extract_strided_slice %9 {offsets = [0, 0], sizes = [1, 128], strides = [1, 1]} : vector<6x128xf32> to vector<1x128xf32>
    %88 = arith.addf %67, %87 : vector<1x128xf32>
    %cst_21 = arith.constant dense<0xFF800000> : vector<1xf32>
    %89 = vector.multi_reduction <maximumf>, %88, %cst_21 [1] : vector<1x128xf32> to vector<1xf32>
    %90 = vector.shape_cast %89 : vector<1xf32> to vector<1x1xf32>
    %91 = vector.broadcast %90 : vector<1x1xf32> to vector<1x128xf32>
    %92 = arith.cmpf oge, %88, %91 : vector<1x128xf32>
    %c128_i32 = arith.constant 128 : i32
    %93 = vector.broadcast %c128_i32 : i32 to vector<1x128xi32>
    %94 = arith.select %92, %10, %93 : vector<1x128xi1>, vector<1x128xi32>
    %cst_22 = arith.constant dense<2147483647> : vector<1xi32>
    %95 = vector.multi_reduction <minsi>, %94, %cst_22 [1] : vector<1x128xi32> to vector<1xi32>
    %96 = vector.shape_cast %95 : vector<1xi32> to vector<1x1xi32>
    %97 = vector.broadcast %96 : vector<1x1xi32> to vector<1x128xi32>
    %98 = arith.cmpi eq, %10, %97 : vector<1x128xi32>
    %99 = arith.extui %98 : vector<1x128xi1> to vector<1x128xi32>
    %100 = arith.sitofp %99 : vector<1x128xi32> to vector<1x128xf32>
    %101 = arith.mulf %100, %77 : vector<1x128xf32>
    %cst_23 = arith.constant dense<0.000000e+00> : vector<1xf32>
    %102 = vector.multi_reduction <add>, %101, %cst_23 [1] : vector<1x128xf32> to vector<1xf32>
    %103 = vector.shape_cast %102 : vector<1xf32> to vector<1x1xf32>
    %104 = arith.addf %18, %103 : vector<1x1xf32>
    %105 = arith.sitofp %96 : vector<1x1xi32> to vector<1x1xf32>
    %c2_i32 = arith.constant 2 : i32
    %106 = vector.broadcast %c2_i32 : i32 to vector<1x128xi32>
    %107 = arith.cmpi eq, %10, %106 : vector<1x128xi32>
    %108 = arith.extui %107 : vector<1x128xi1> to vector<1x128xi32>
    %109 = arith.sitofp %108 : vector<1x128xi32> to vector<1x128xf32>
    %110 = vector.broadcast %105 : vector<1x1xf32> to vector<1x128xf32>
    %111 = arith.mulf %110, %109 : vector<1x128xf32>
    %112 = arith.addf %20, %111 : vector<1x128xf32>
    %113 = vector.broadcast %96 : vector<1x1xi32> to vector<5x1xi32>
    %114 = arith.cmpi eq, %13, %113 : vector<5x1xi32>
    %cst_24 = arith.constant 0.000000e+00 : f32
    %115 = vector.shape_cast %114 : vector<5x1xi1> to vector<5x1xi1>
    %116 = vector.broadcast %115 : vector<5x1xi1> to vector<5x128xi1>
    %117 = vector.broadcast %cst_24 : f32 to vector<5x128xf32>
    %118 = arith.select %116, %8, %117 : vector<5x128xi1>, vector<5x128xf32>
    %cst_25 = arith.constant dense<0.000000e+00> : vector<128xf32>
    %119 = vector.multi_reduction <add>, %118, %cst_25 [0] : vector<5x128xf32> to vector<128xf32>
    %120 = vector.shape_cast %119 : vector<128xf32> to vector<1x128xf32>
    %121 = arith.truncf %38 : vector<1x32xf32> to vector<1x32xbf16>
    %cst_26 = arith.constant dense<0.000000e+00> : vector<1x128xf32>
    %122 = tpu.matmul %121, %2, %cst_26 {dimension_numbers = #tpu.dot_dimension_numbers<[1], [0], [0], [1], [0, 0, 1, 1], [], []>} : vector<1x32xbf16>, vector<32x128xbf16>, vector<1x128xf32> -> vector<1x128xf32>
    %123 = arith.addf %120, %122 : vector<1x128xf32>
    %124 = arith.negf %123 : vector<1x128xf32>
    %125 = math.exp %124 : vector<1x128xf32>
    %cst_27 = arith.constant 1.000000e+00 : f32
    %126 = vector.broadcast %cst_27 : f32 to vector<1x128xf32>
    %127 = arith.addf %126, %125 : vector<1x128xf32>
    %128 = arith.divf %126, %127 : vector<1x128xf32>
    %129 = math.tanh %123 : vector<1x128xf32>
    %130 = vector.extract_strided_slice %128 {offsets = [0, 0], sizes = [1, 32], strides = [1, 1]} : vector<1x128xf32> to vector<1x32xf32>
    %131 = vector.extract_strided_slice %128 {offsets = [0, 32], sizes = [1, 32], strides = [1, 1]} : vector<1x128xf32> to vector<1x32xf32>
    %132 = vector.extract_strided_slice %129 {offsets = [0, 64], sizes = [1, 32], strides = [1, 1]} : vector<1x128xf32> to vector<1x32xf32>
    %133 = vector.extract_strided_slice %128 {offsets = [0, 96], sizes = [1, 32], strides = [1, 1]} : vector<1x128xf32> to vector<1x32xf32>
    %134 = arith.mulf %131, %36 : vector<1x32xf32>
    %135 = arith.mulf %130, %132 : vector<1x32xf32>
    %136 = arith.addf %134, %135 : vector<1x32xf32>
    %137 = math.tanh %136 : vector<1x32xf32>
    %138 = arith.mulf %133, %137 : vector<1x32xf32>
    %139 = tpu.concatenate %138, %57 in 1 : vector<1x32xf32>, vector<1x32xf32> -> vector<1x64xf32>
    %140 = arith.truncf %139 : vector<1x64xf32> to vector<1x64xbf16>
    %cst_28 = arith.constant dense<0.000000e+00> : vector<1x128xf32>
    %141 = tpu.matmul %140, %1, %cst_28 {dimension_numbers = #tpu.dot_dimension_numbers<[1], [0], [0], [1], [0, 0, 1, 1], [], []>} : vector<1x64xbf16>, vector<64x128xbf16>, vector<1x128xf32> -> vector<1x128xf32>
    %142 = arith.addf %141, %6 : vector<1x128xf32>
    %143 = arith.negf %142 : vector<1x128xf32>
    %144 = math.exp %143 : vector<1x128xf32>
    %cst_29 = arith.constant 1.000000e+00 : f32
    %145 = vector.broadcast %cst_29 : f32 to vector<1x128xf32>
    %146 = arith.addf %145, %144 : vector<1x128xf32>
    %147 = arith.divf %145, %146 : vector<1x128xf32>
    %148 = math.tanh %142 : vector<1x128xf32>
    %149 = vector.extract_strided_slice %147 {offsets = [0, 0], sizes = [1, 32], strides = [1, 1]} : vector<1x128xf32> to vector<1x32xf32>
    %150 = vector.extract_strided_slice %147 {offsets = [0, 32], sizes = [1, 32], strides = [1, 1]} : vector<1x128xf32> to vector<1x32xf32>
    %151 = vector.extract_strided_slice %148 {offsets = [0, 64], sizes = [1, 32], strides = [1, 1]} : vector<1x128xf32> to vector<1x32xf32>
    %152 = vector.extract_strided_slice %147 {offsets = [0, 96], sizes = [1, 32], strides = [1, 1]} : vector<1x128xf32> to vector<1x32xf32>
    %153 = arith.mulf %150, %55 : vector<1x32xf32>
    %154 = arith.mulf %149, %151 : vector<1x32xf32>
    %155 = arith.addf %153, %154 : vector<1x32xf32>
    %156 = math.tanh %155 : vector<1x32xf32>
    %157 = arith.mulf %152, %156 : vector<1x32xf32>
    %158 = arith.truncf %157 : vector<1x32xf32> to vector<1x32xbf16>
    %cst_30 = arith.constant dense<0.000000e+00> : vector<1x128xf32>
    %159 = tpu.matmul %158, %3, %cst_30 {dimension_numbers = #tpu.dot_dimension_numbers<[1], [0], [0], [1], [0, 0, 1, 1], [], []>} : vector<1x32xbf16>, vector<32x128xbf16>, vector<1x128xf32> -> vector<1x128xf32>
    %160 = arith.addf %159, %7 : vector<1x128xf32>
    %cst_31 = arith.constant 2.000000e-01 : f32
    %161 = vector.broadcast %cst_31 : f32 to vector<1x128xf32>
    %162 = arith.mulf %160, %161 : vector<1x128xf32>
    %163 = math.tanh %162 : vector<1x128xf32>
    %cst_32 = arith.constant 2.500000e+00 : f32
    %164 = vector.broadcast %cst_32 : f32 to vector<1x128xf32>
    %165 = arith.mulf %164, %163 : vector<1x128xf32>
    %cst_33 = arith.constant -1.000000e+30 : f32
    %166 = vector.broadcast %cst_33 : f32 to vector<1x128xf32>
    %167 = arith.select %12, %165, %166 : vector<1x128xi1>, vector<1x128xf32>
    %cst_34 = arith.constant dense<0xFF800000> : vector<1xf32>
    %168 = vector.multi_reduction <maximumf>, %167, %cst_34 [1] : vector<1x128xf32> to vector<1xf32>
    %169 = vector.shape_cast %168 : vector<1xf32> to vector<1x1xf32>
    %170 = vector.broadcast %169 : vector<1x1xf32> to vector<1x128xf32>
    %171 = arith.subf %167, %170 : vector<1x128xf32>
    %172 = math.exp %171 : vector<1x128xf32>
    %cst_35 = arith.constant dense<0.000000e+00> : vector<1xf32>
    %173 = vector.multi_reduction <add>, %172, %cst_35 [1] : vector<1x128xf32> to vector<1xf32>
    %174 = vector.shape_cast %173 : vector<1xf32> to vector<1x1xf32>
    %175 = math.log %174 : vector<1x1xf32>
    %176 = vector.broadcast %175 : vector<1x1xf32> to vector<1x128xf32>
    %177 = arith.subf %171, %176 : vector<1x128xf32>
    %178 = tpu.reciprocal %174 {approx = true} : vector<1x1xf32> -> vector<1x1xf32>
    %179 = vector.broadcast %178 : vector<1x1xf32> to vector<1x128xf32>
    %180 = arith.mulf %172, %179 : vector<1x128xf32>
    %181 = arith.mulf %180, %177 : vector<1x128xf32>
    %cst_36 = arith.constant 0.000000e+00 : f32
    %182 = vector.broadcast %cst_36 : f32 to vector<1x128xf32>
    %183 = arith.select %12, %181, %182 : vector<1x128xi1>, vector<1x128xf32>
    %cst_37 = arith.constant dense<0.000000e+00> : vector<1xf32>
    %184 = vector.multi_reduction <add>, %183, %cst_37 [1] : vector<1x128xf32> to vector<1xf32>
    %185 = vector.shape_cast %184 : vector<1xf32> to vector<1x1xf32>
    %186 = arith.subf %86, %185 : vector<1x1xf32>
    %187 = vector.extract_strided_slice %9 {offsets = [1, 0], sizes = [1, 128], strides = [1, 1]} : vector<6x128xf32> to vector<1x128xf32>
    %188 = arith.addf %167, %187 : vector<1x128xf32>
    %cst_38 = arith.constant dense<0xFF800000> : vector<1xf32>
    %189 = vector.multi_reduction <maximumf>, %188, %cst_38 [1] : vector<1x128xf32> to vector<1xf32>
    %190 = vector.shape_cast %189 : vector<1xf32> to vector<1x1xf32>
    %191 = vector.broadcast %190 : vector<1x1xf32> to vector<1x128xf32>
    %192 = arith.cmpf oge, %188, %191 : vector<1x128xf32>
    %c128_i32_39 = arith.constant 128 : i32
    %193 = vector.broadcast %c128_i32_39 : i32 to vector<1x128xi32>
    %194 = arith.select %192, %10, %193 : vector<1x128xi1>, vector<1x128xi32>
    %cst_40 = arith.constant dense<2147483647> : vector<1xi32>
    %195 = vector.multi_reduction <minsi>, %194, %cst_40 [1] : vector<1x128xi32> to vector<1xi32>
    %196 = vector.shape_cast %195 : vector<1xi32> to vector<1x1xi32>
    %197 = vector.broadcast %196 : vector<1x1xi32> to vector<1x128xi32>
    %198 = arith.cmpi eq, %10, %197 : vector<1x128xi32>
    %199 = arith.extui %198 : vector<1x128xi1> to vector<1x128xi32>
    %200 = arith.sitofp %199 : vector<1x128xi32> to vector<1x128xf32>
    %201 = arith.mulf %200, %177 : vector<1x128xf32>
    %cst_41 = arith.constant dense<0.000000e+00> : vector<1xf32>
    %202 = vector.multi_reduction <add>, %201, %cst_41 [1] : vector<1x128xf32> to vector<1xf32>
    %203 = vector.shape_cast %202 : vector<1xf32> to vector<1x1xf32>
    %204 = arith.addf %104, %203 : vector<1x1xf32>
    %205 = arith.sitofp %196 : vector<1x1xi32> to vector<1x1xf32>
    %c3_i32 = arith.constant 3 : i32
    %206 = vector.broadcast %c3_i32 : i32 to vector<1x128xi32>
    %207 = arith.cmpi eq, %10, %206 : vector<1x128xi32>
    %208 = arith.extui %207 : vector<1x128xi1> to vector<1x128xi32>
    %209 = arith.sitofp %208 : vector<1x128xi32> to vector<1x128xf32>
    %210 = vector.broadcast %205 : vector<1x1xf32> to vector<1x128xf32>
    %211 = arith.mulf %210, %209 : vector<1x128xf32>
    %212 = arith.addf %112, %211 : vector<1x128xf32>
    %213 = vector.broadcast %196 : vector<1x1xi32> to vector<5x1xi32>
    %214 = arith.cmpi eq, %13, %213 : vector<5x1xi32>
    %cst_42 = arith.constant 0.000000e+00 : f32
    %215 = vector.shape_cast %214 : vector<5x1xi1> to vector<5x1xi1>
    %216 = vector.broadcast %215 : vector<5x1xi1> to vector<5x128xi1>
    %217 = vector.broadcast %cst_42 : f32 to vector<5x128xf32>
    %218 = arith.select %216, %8, %217 : vector<5x128xi1>, vector<5x128xf32>
    %cst_43 = arith.constant dense<0.000000e+00> : vector<128xf32>
    %219 = vector.multi_reduction <add>, %218, %cst_43 [0] : vector<5x128xf32> to vector<128xf32>
    %220 = vector.shape_cast %219 : vector<128xf32> to vector<1x128xf32>
    %221 = arith.truncf %138 : vector<1x32xf32> to vector<1x32xbf16>
    %cst_44 = arith.constant dense<0.000000e+00> : vector<1x128xf32>
    %222 = tpu.matmul %221, %2, %cst_44 {dimension_numbers = #tpu.dot_dimension_numbers<[1], [0], [0], [1], [0, 0, 1, 1], [], []>} : vector<1x32xbf16>, vector<32x128xbf16>, vector<1x128xf32> -> vector<1x128xf32>
    %223 = arith.addf %220, %222 : vector<1x128xf32>
    %224 = arith.negf %223 : vector<1x128xf32>
    %225 = math.exp %224 : vector<1x128xf32>
    %cst_45 = arith.constant 1.000000e+00 : f32
    %226 = vector.broadcast %cst_45 : f32 to vector<1x128xf32>
    %227 = arith.addf %226, %225 : vector<1x128xf32>
    %228 = arith.divf %226, %227 : vector<1x128xf32>
    %229 = math.tanh %223 : vector<1x128xf32>
    %230 = vector.extract_strided_slice %228 {offsets = [0, 0], sizes = [1, 32], strides = [1, 1]} : vector<1x128xf32> to vector<1x32xf32>
    %231 = vector.extract_strided_slice %228 {offsets = [0, 32], sizes = [1, 32], strides = [1, 1]} : vector<1x128xf32> to vector<1x32xf32>
    %232 = vector.extract_strided_slice %229 {offsets = [0, 64], sizes = [1, 32], strides = [1, 1]} : vector<1x128xf32> to vector<1x32xf32>
    %233 = vector.extract_strided_slice %228 {offsets = [0, 96], sizes = [1, 32], strides = [1, 1]} : vector<1x128xf32> to vector<1x32xf32>
    %234 = arith.mulf %231, %136 : vector<1x32xf32>
    %235 = arith.mulf %230, %232 : vector<1x32xf32>
    %236 = arith.addf %234, %235 : vector<1x32xf32>
    %237 = math.tanh %236 : vector<1x32xf32>
    %238 = arith.mulf %233, %237 : vector<1x32xf32>
    %239 = tpu.concatenate %238, %157 in 1 : vector<1x32xf32>, vector<1x32xf32> -> vector<1x64xf32>
    %240 = arith.truncf %239 : vector<1x64xf32> to vector<1x64xbf16>
    %cst_46 = arith.constant dense<0.000000e+00> : vector<1x128xf32>
    %241 = tpu.matmul %240, %1, %cst_46 {dimension_numbers = #tpu.dot_dimension_numbers<[1], [0], [0], [1], [0, 0, 1, 1], [], []>} : vector<1x64xbf16>, vector<64x128xbf16>, vector<1x128xf32> -> vector<1x128xf32>
    %242 = arith.addf %241, %6 : vector<1x128xf32>
    %243 = arith.negf %242 : vector<1x128xf32>
    %244 = math.exp %243 : vector<1x128xf32>
    %cst_47 = arith.constant 1.000000e+00 : f32
    %245 = vector.broadcast %cst_47 : f32 to vector<1x128xf32>
    %246 = arith.addf %245, %244 : vector<1x128xf32>
    %247 = arith.divf %245, %246 : vector<1x128xf32>
    %248 = math.tanh %242 : vector<1x128xf32>
    %249 = vector.extract_strided_slice %247 {offsets = [0, 0], sizes = [1, 32], strides = [1, 1]} : vector<1x128xf32> to vector<1x32xf32>
    %250 = vector.extract_strided_slice %247 {offsets = [0, 32], sizes = [1, 32], strides = [1, 1]} : vector<1x128xf32> to vector<1x32xf32>
    %251 = vector.extract_strided_slice %248 {offsets = [0, 64], sizes = [1, 32], strides = [1, 1]} : vector<1x128xf32> to vector<1x32xf32>
    %252 = vector.extract_strided_slice %247 {offsets = [0, 96], sizes = [1, 32], strides = [1, 1]} : vector<1x128xf32> to vector<1x32xf32>
    %253 = arith.mulf %250, %155 : vector<1x32xf32>
    %254 = arith.mulf %249, %251 : vector<1x32xf32>
    %255 = arith.addf %253, %254 : vector<1x32xf32>
    %256 = math.tanh %255 : vector<1x32xf32>
    %257 = arith.mulf %252, %256 : vector<1x32xf32>
    %258 = arith.truncf %257 : vector<1x32xf32> to vector<1x32xbf16>
    %cst_48 = arith.constant dense<0.000000e+00> : vector<1x128xf32>
    %259 = tpu.matmul %258, %3, %cst_48 {dimension_numbers = #tpu.dot_dimension_numbers<[1], [0], [0], [1], [0, 0, 1, 1], [], []>} : vector<1x32xbf16>, vector<32x128xbf16>, vector<1x128xf32> -> vector<1x128xf32>
    %260 = arith.addf %259, %7 : vector<1x128xf32>
    %cst_49 = arith.constant 2.000000e-01 : f32
    %261 = vector.broadcast %cst_49 : f32 to vector<1x128xf32>
    %262 = arith.mulf %260, %261 : vector<1x128xf32>
    %263 = math.tanh %262 : vector<1x128xf32>
    %cst_50 = arith.constant 2.500000e+00 : f32
    %264 = vector.broadcast %cst_50 : f32 to vector<1x128xf32>
    %265 = arith.mulf %264, %263 : vector<1x128xf32>
    %cst_51 = arith.constant -1.000000e+30 : f32
    %266 = vector.broadcast %cst_51 : f32 to vector<1x128xf32>
    %267 = arith.select %12, %265, %266 : vector<1x128xi1>, vector<1x128xf32>
    %cst_52 = arith.constant dense<0xFF800000> : vector<1xf32>
    %268 = vector.multi_reduction <maximumf>, %267, %cst_52 [1] : vector<1x128xf32> to vector<1xf32>
    %269 = vector.shape_cast %268 : vector<1xf32> to vector<1x1xf32>
    %270 = vector.broadcast %269 : vector<1x1xf32> to vector<1x128xf32>
    %271 = arith.subf %267, %270 : vector<1x128xf32>
    %272 = math.exp %271 : vector<1x128xf32>
    %cst_53 = arith.constant dense<0.000000e+00> : vector<1xf32>
    %273 = vector.multi_reduction <add>, %272, %cst_53 [1] : vector<1x128xf32> to vector<1xf32>
    %274 = vector.shape_cast %273 : vector<1xf32> to vector<1x1xf32>
    %275 = math.log %274 : vector<1x1xf32>
    %276 = vector.broadcast %275 : vector<1x1xf32> to vector<1x128xf32>
    %277 = arith.subf %271, %276 : vector<1x128xf32>
    %278 = tpu.reciprocal %274 {approx = true} : vector<1x1xf32> -> vector<1x1xf32>
    %279 = vector.broadcast %278 : vector<1x1xf32> to vector<1x128xf32>
    %280 = arith.mulf %272, %279 : vector<1x128xf32>
    %281 = arith.mulf %280, %277 : vector<1x128xf32>
    %cst_54 = arith.constant 0.000000e+00 : f32
    %282 = vector.broadcast %cst_54 : f32 to vector<1x128xf32>
    %283 = arith.select %12, %281, %282 : vector<1x128xi1>, vector<1x128xf32>
    %cst_55 = arith.constant dense<0.000000e+00> : vector<1xf32>
    %284 = vector.multi_reduction <add>, %283, %cst_55 [1] : vector<1x128xf32> to vector<1xf32>
    %285 = vector.shape_cast %284 : vector<1xf32> to vector<1x1xf32>
    %286 = arith.subf %186, %285 : vector<1x1xf32>
    %287 = vector.extract_strided_slice %9 {offsets = [2, 0], sizes = [1, 128], strides = [1, 1]} : vector<6x128xf32> to vector<1x128xf32>
    %288 = arith.addf %267, %287 : vector<1x128xf32>
    %cst_56 = arith.constant dense<0xFF800000> : vector<1xf32>
    %289 = vector.multi_reduction <maximumf>, %288, %cst_56 [1] : vector<1x128xf32> to vector<1xf32>
    %290 = vector.shape_cast %289 : vector<1xf32> to vector<1x1xf32>
    %291 = vector.broadcast %290 : vector<1x1xf32> to vector<1x128xf32>
    %292 = arith.cmpf oge, %288, %291 : vector<1x128xf32>
    %c128_i32_57 = arith.constant 128 : i32
    %293 = vector.broadcast %c128_i32_57 : i32 to vector<1x128xi32>
    %294 = arith.select %292, %10, %293 : vector<1x128xi1>, vector<1x128xi32>
    %cst_58 = arith.constant dense<2147483647> : vector<1xi32>
    %295 = vector.multi_reduction <minsi>, %294, %cst_58 [1] : vector<1x128xi32> to vector<1xi32>
    %296 = vector.shape_cast %295 : vector<1xi32> to vector<1x1xi32>
    %297 = vector.broadcast %296 : vector<1x1xi32> to vector<1x128xi32>
    %298 = arith.cmpi eq, %10, %297 : vector<1x128xi32>
    %299 = arith.extui %298 : vector<1x128xi1> to vector<1x128xi32>
    %300 = arith.sitofp %299 : vector<1x128xi32> to vector<1x128xf32>
    %301 = arith.mulf %300, %277 : vector<1x128xf32>
    %cst_59 = arith.constant dense<0.000000e+00> : vector<1xf32>
    %302 = vector.multi_reduction <add>, %301, %cst_59 [1] : vector<1x128xf32> to vector<1xf32>
    %303 = vector.shape_cast %302 : vector<1xf32> to vector<1x1xf32>
    %304 = arith.addf %204, %303 : vector<1x1xf32>
    %305 = arith.sitofp %296 : vector<1x1xi32> to vector<1x1xf32>
    %c4_i32 = arith.constant 4 : i32
    %306 = vector.broadcast %c4_i32 : i32 to vector<1x128xi32>
    %307 = arith.cmpi eq, %10, %306 : vector<1x128xi32>
    %308 = arith.extui %307 : vector<1x128xi1> to vector<1x128xi32>
    %309 = arith.sitofp %308 : vector<1x128xi32> to vector<1x128xf32>
    %310 = vector.broadcast %305 : vector<1x1xf32> to vector<1x128xf32>
    %311 = arith.mulf %310, %309 : vector<1x128xf32>
    %312 = arith.addf %212, %311 : vector<1x128xf32>
    %313 = vector.broadcast %296 : vector<1x1xi32> to vector<5x1xi32>
    %314 = arith.cmpi eq, %13, %313 : vector<5x1xi32>
    %cst_60 = arith.constant 0.000000e+00 : f32
    %315 = vector.shape_cast %314 : vector<5x1xi1> to vector<5x1xi1>
    %316 = vector.broadcast %315 : vector<5x1xi1> to vector<5x128xi1>
    %317 = vector.broadcast %cst_60 : f32 to vector<5x128xf32>
    %318 = arith.select %316, %8, %317 : vector<5x128xi1>, vector<5x128xf32>
    %cst_61 = arith.constant dense<0.000000e+00> : vector<128xf32>
    %319 = vector.multi_reduction <add>, %318, %cst_61 [0] : vector<5x128xf32> to vector<128xf32>
    %320 = vector.shape_cast %319 : vector<128xf32> to vector<1x128xf32>
    %321 = arith.truncf %238 : vector<1x32xf32> to vector<1x32xbf16>
    %cst_62 = arith.constant dense<0.000000e+00> : vector<1x128xf32>
    %322 = tpu.matmul %321, %2, %cst_62 {dimension_numbers = #tpu.dot_dimension_numbers<[1], [0], [0], [1], [0, 0, 1, 1], [], []>} : vector<1x32xbf16>, vector<32x128xbf16>, vector<1x128xf32> -> vector<1x128xf32>
    %323 = arith.addf %320, %322 : vector<1x128xf32>
    %324 = arith.negf %323 : vector<1x128xf32>
    %325 = math.exp %324 : vector<1x128xf32>
    %cst_63 = arith.constant 1.000000e+00 : f32
    %326 = vector.broadcast %cst_63 : f32 to vector<1x128xf32>
    %327 = arith.addf %326, %325 : vector<1x128xf32>
    %328 = arith.divf %326, %327 : vector<1x128xf32>
    %329 = math.tanh %323 : vector<1x128xf32>
    %330 = vector.extract_strided_slice %328 {offsets = [0, 0], sizes = [1, 32], strides = [1, 1]} : vector<1x128xf32> to vector<1x32xf32>
    %331 = vector.extract_strided_slice %328 {offsets = [0, 32], sizes = [1, 32], strides = [1, 1]} : vector<1x128xf32> to vector<1x32xf32>
    %332 = vector.extract_strided_slice %329 {offsets = [0, 64], sizes = [1, 32], strides = [1, 1]} : vector<1x128xf32> to vector<1x32xf32>
    %333 = vector.extract_strided_slice %328 {offsets = [0, 96], sizes = [1, 32], strides = [1, 1]} : vector<1x128xf32> to vector<1x32xf32>
    %334 = arith.mulf %331, %236 : vector<1x32xf32>
    %335 = arith.mulf %330, %332 : vector<1x32xf32>
    %336 = arith.addf %334, %335 : vector<1x32xf32>
    %337 = math.tanh %336 : vector<1x32xf32>
    %338 = arith.mulf %333, %337 : vector<1x32xf32>
    %339 = tpu.concatenate %338, %257 in 1 : vector<1x32xf32>, vector<1x32xf32> -> vector<1x64xf32>
    %340 = arith.truncf %339 : vector<1x64xf32> to vector<1x64xbf16>
    %cst_64 = arith.constant dense<0.000000e+00> : vector<1x128xf32>
    %341 = tpu.matmul %340, %1, %cst_64 {dimension_numbers = #tpu.dot_dimension_numbers<[1], [0], [0], [1], [0, 0, 1, 1], [], []>} : vector<1x64xbf16>, vector<64x128xbf16>, vector<1x128xf32> -> vector<1x128xf32>
    %342 = arith.addf %341, %6 : vector<1x128xf32>
    %343 = arith.negf %342 : vector<1x128xf32>
    %344 = math.exp %343 : vector<1x128xf32>
    %cst_65 = arith.constant 1.000000e+00 : f32
    %345 = vector.broadcast %cst_65 : f32 to vector<1x128xf32>
    %346 = arith.addf %345, %344 : vector<1x128xf32>
    %347 = arith.divf %345, %346 : vector<1x128xf32>
    %348 = math.tanh %342 : vector<1x128xf32>
    %349 = vector.extract_strided_slice %347 {offsets = [0, 0], sizes = [1, 32], strides = [1, 1]} : vector<1x128xf32> to vector<1x32xf32>
    %350 = vector.extract_strided_slice %347 {offsets = [0, 32], sizes = [1, 32], strides = [1, 1]} : vector<1x128xf32> to vector<1x32xf32>
    %351 = vector.extract_strided_slice %348 {offsets = [0, 64], sizes = [1, 32], strides = [1, 1]} : vector<1x128xf32> to vector<1x32xf32>
    %352 = vector.extract_strided_slice %347 {offsets = [0, 96], sizes = [1, 32], strides = [1, 1]} : vector<1x128xf32> to vector<1x32xf32>
    %353 = arith.mulf %350, %255 : vector<1x32xf32>
    %354 = arith.mulf %349, %351 : vector<1x32xf32>
    %355 = arith.addf %353, %354 : vector<1x32xf32>
    %356 = math.tanh %355 : vector<1x32xf32>
    %357 = arith.mulf %352, %356 : vector<1x32xf32>
    %358 = arith.truncf %357 : vector<1x32xf32> to vector<1x32xbf16>
    %cst_66 = arith.constant dense<0.000000e+00> : vector<1x128xf32>
    %359 = tpu.matmul %358, %3, %cst_66 {dimension_numbers = #tpu.dot_dimension_numbers<[1], [0], [0], [1], [0, 0, 1, 1], [], []>} : vector<1x32xbf16>, vector<32x128xbf16>, vector<1x128xf32> -> vector<1x128xf32>
    %360 = arith.addf %359, %7 : vector<1x128xf32>
    %cst_67 = arith.constant 2.000000e-01 : f32
    %361 = vector.broadcast %cst_67 : f32 to vector<1x128xf32>
    %362 = arith.mulf %360, %361 : vector<1x128xf32>
    %363 = math.tanh %362 : vector<1x128xf32>
    %cst_68 = arith.constant 2.500000e+00 : f32
    %364 = vector.broadcast %cst_68 : f32 to vector<1x128xf32>
    %365 = arith.mulf %364, %363 : vector<1x128xf32>
    %cst_69 = arith.constant -1.000000e+30 : f32
    %366 = vector.broadcast %cst_69 : f32 to vector<1x128xf32>
    %367 = arith.select %12, %365, %366 : vector<1x128xi1>, vector<1x128xf32>
    %cst_70 = arith.constant dense<0xFF800000> : vector<1xf32>
    %368 = vector.multi_reduction <maximumf>, %367, %cst_70 [1] : vector<1x128xf32> to vector<1xf32>
    %369 = vector.shape_cast %368 : vector<1xf32> to vector<1x1xf32>
    %370 = vector.broadcast %369 : vector<1x1xf32> to vector<1x128xf32>
    %371 = arith.subf %367, %370 : vector<1x128xf32>
    %372 = math.exp %371 : vector<1x128xf32>
    %cst_71 = arith.constant dense<0.000000e+00> : vector<1xf32>
    %373 = vector.multi_reduction <add>, %372, %cst_71 [1] : vector<1x128xf32> to vector<1xf32>
    %374 = vector.shape_cast %373 : vector<1xf32> to vector<1x1xf32>
    %375 = math.log %374 : vector<1x1xf32>
    %376 = vector.broadcast %375 : vector<1x1xf32> to vector<1x128xf32>
    %377 = arith.subf %371, %376 : vector<1x128xf32>
    %378 = tpu.reciprocal %374 {approx = true} : vector<1x1xf32> -> vector<1x1xf32>
    %379 = vector.broadcast %378 : vector<1x1xf32> to vector<1x128xf32>
    %380 = arith.mulf %372, %379 : vector<1x128xf32>
    %381 = arith.mulf %380, %377 : vector<1x128xf32>
    %cst_72 = arith.constant 0.000000e+00 : f32
    %382 = vector.broadcast %cst_72 : f32 to vector<1x128xf32>
    %383 = arith.select %12, %381, %382 : vector<1x128xi1>, vector<1x128xf32>
    %cst_73 = arith.constant dense<0.000000e+00> : vector<1xf32>
    %384 = vector.multi_reduction <add>, %383, %cst_73 [1] : vector<1x128xf32> to vector<1xf32>
    %385 = vector.shape_cast %384 : vector<1xf32> to vector<1x1xf32>
    %386 = arith.subf %286, %385 : vector<1x1xf32>
    %387 = vector.extract_strided_slice %9 {offsets = [3, 0], sizes = [1, 128], strides = [1, 1]} : vector<6x128xf32> to vector<1x128xf32>
    %388 = arith.addf %367, %387 : vector<1x128xf32>
    %cst_74 = arith.constant dense<0xFF800000> : vector<1xf32>
    %389 = vector.multi_reduction <maximumf>, %388, %cst_74 [1] : vector<1x128xf32> to vector<1xf32>
    %390 = vector.shape_cast %389 : vector<1xf32> to vector<1x1xf32>
    %391 = vector.broadcast %390 : vector<1x1xf32> to vector<1x128xf32>
    %392 = arith.cmpf oge, %388, %391 : vector<1x128xf32>
    %c128_i32_75 = arith.constant 128 : i32
    %393 = vector.broadcast %c128_i32_75 : i32 to vector<1x128xi32>
    %394 = arith.select %392, %10, %393 : vector<1x128xi1>, vector<1x128xi32>
    %cst_76 = arith.constant dense<2147483647> : vector<1xi32>
    %395 = vector.multi_reduction <minsi>, %394, %cst_76 [1] : vector<1x128xi32> to vector<1xi32>
    %396 = vector.shape_cast %395 : vector<1xi32> to vector<1x1xi32>
    %397 = vector.broadcast %396 : vector<1x1xi32> to vector<1x128xi32>
    %398 = arith.cmpi eq, %10, %397 : vector<1x128xi32>
    %399 = arith.extui %398 : vector<1x128xi1> to vector<1x128xi32>
    %400 = arith.sitofp %399 : vector<1x128xi32> to vector<1x128xf32>
    %401 = arith.mulf %400, %377 : vector<1x128xf32>
    %cst_77 = arith.constant dense<0.000000e+00> : vector<1xf32>
    %402 = vector.multi_reduction <add>, %401, %cst_77 [1] : vector<1x128xf32> to vector<1xf32>
    %403 = vector.shape_cast %402 : vector<1xf32> to vector<1x1xf32>
    %404 = arith.addf %304, %403 : vector<1x1xf32>
    %405 = arith.sitofp %396 : vector<1x1xi32> to vector<1x1xf32>
    %c5_i32_78 = arith.constant 5 : i32
    %406 = vector.broadcast %c5_i32_78 : i32 to vector<1x128xi32>
    %407 = arith.cmpi eq, %10, %406 : vector<1x128xi32>
    %408 = arith.extui %407 : vector<1x128xi1> to vector<1x128xi32>
    %409 = arith.sitofp %408 : vector<1x128xi32> to vector<1x128xf32>
    %410 = vector.broadcast %405 : vector<1x1xf32> to vector<1x128xf32>
    %411 = arith.mulf %410, %409 : vector<1x128xf32>
    %412 = arith.addf %312, %411 : vector<1x128xf32>
    %413 = vector.broadcast %396 : vector<1x1xi32> to vector<5x1xi32>
    %414 = arith.cmpi eq, %13, %413 : vector<5x1xi32>
    %cst_79 = arith.constant 0.000000e+00 : f32
    %415 = vector.shape_cast %414 : vector<5x1xi1> to vector<5x1xi1>
    %416 = vector.broadcast %415 : vector<5x1xi1> to vector<5x128xi1>
    %417 = vector.broadcast %cst_79 : f32 to vector<5x128xf32>
    %418 = arith.select %416, %8, %417 : vector<5x128xi1>, vector<5x128xf32>
    %cst_80 = arith.constant dense<0.000000e+00> : vector<128xf32>
    %419 = vector.multi_reduction <add>, %418, %cst_80 [0] : vector<5x128xf32> to vector<128xf32>
    %420 = vector.shape_cast %419 : vector<128xf32> to vector<1x128xf32>
    %421 = arith.truncf %338 : vector<1x32xf32> to vector<1x32xbf16>
    %cst_81 = arith.constant dense<0.000000e+00> : vector<1x128xf32>
    %422 = tpu.matmul %421, %2, %cst_81 {dimension_numbers = #tpu.dot_dimension_numbers<[1], [0], [0], [1], [0, 0, 1, 1], [], []>} : vector<1x32xbf16>, vector<32x128xbf16>, vector<1x128xf32> -> vector<1x128xf32>
    %423 = arith.addf %420, %422 : vector<1x128xf32>
    %424 = arith.negf %423 : vector<1x128xf32>
    %425 = math.exp %424 : vector<1x128xf32>
    %cst_82 = arith.constant 1.000000e+00 : f32
    %426 = vector.broadcast %cst_82 : f32 to vector<1x128xf32>
    %427 = arith.addf %426, %425 : vector<1x128xf32>
    %428 = arith.divf %426, %427 : vector<1x128xf32>
    %429 = math.tanh %423 : vector<1x128xf32>
    %430 = vector.extract_strided_slice %428 {offsets = [0, 0], sizes = [1, 32], strides = [1, 1]} : vector<1x128xf32> to vector<1x32xf32>
    %431 = vector.extract_strided_slice %428 {offsets = [0, 32], sizes = [1, 32], strides = [1, 1]} : vector<1x128xf32> to vector<1x32xf32>
    %432 = vector.extract_strided_slice %429 {offsets = [0, 64], sizes = [1, 32], strides = [1, 1]} : vector<1x128xf32> to vector<1x32xf32>
    %433 = vector.extract_strided_slice %428 {offsets = [0, 96], sizes = [1, 32], strides = [1, 1]} : vector<1x128xf32> to vector<1x32xf32>
    %434 = arith.mulf %431, %336 : vector<1x32xf32>
    %435 = arith.mulf %430, %432 : vector<1x32xf32>
    %436 = arith.addf %434, %435 : vector<1x32xf32>
    %437 = math.tanh %436 : vector<1x32xf32>
    %438 = arith.mulf %433, %437 : vector<1x32xf32>
    %439 = tpu.concatenate %438, %357 in 1 : vector<1x32xf32>, vector<1x32xf32> -> vector<1x64xf32>
    %440 = arith.truncf %439 : vector<1x64xf32> to vector<1x64xbf16>
    %cst_83 = arith.constant dense<0.000000e+00> : vector<1x128xf32>
    %441 = tpu.matmul %440, %1, %cst_83 {dimension_numbers = #tpu.dot_dimension_numbers<[1], [0], [0], [1], [0, 0, 1, 1], [], []>} : vector<1x64xbf16>, vector<64x128xbf16>, vector<1x128xf32> -> vector<1x128xf32>
    %442 = arith.addf %441, %6 : vector<1x128xf32>
    %443 = arith.negf %442 : vector<1x128xf32>
    %444 = math.exp %443 : vector<1x128xf32>
    %cst_84 = arith.constant 1.000000e+00 : f32
    %445 = vector.broadcast %cst_84 : f32 to vector<1x128xf32>
    %446 = arith.addf %445, %444 : vector<1x128xf32>
    %447 = arith.divf %445, %446 : vector<1x128xf32>
    %448 = math.tanh %442 : vector<1x128xf32>
    %449 = vector.extract_strided_slice %447 {offsets = [0, 0], sizes = [1, 32], strides = [1, 1]} : vector<1x128xf32> to vector<1x32xf32>
    %450 = vector.extract_strided_slice %447 {offsets = [0, 32], sizes = [1, 32], strides = [1, 1]} : vector<1x128xf32> to vector<1x32xf32>
    %451 = vector.extract_strided_slice %448 {offsets = [0, 64], sizes = [1, 32], strides = [1, 1]} : vector<1x128xf32> to vector<1x32xf32>
    %452 = vector.extract_strided_slice %447 {offsets = [0, 96], sizes = [1, 32], strides = [1, 1]} : vector<1x128xf32> to vector<1x32xf32>
    %453 = arith.mulf %450, %355 : vector<1x32xf32>
    %454 = arith.mulf %449, %451 : vector<1x32xf32>
    %455 = arith.addf %453, %454 : vector<1x32xf32>
    %456 = math.tanh %455 : vector<1x32xf32>
    %457 = arith.mulf %452, %456 : vector<1x32xf32>
    %458 = arith.truncf %457 : vector<1x32xf32> to vector<1x32xbf16>
    %cst_85 = arith.constant dense<0.000000e+00> : vector<1x128xf32>
    %459 = tpu.matmul %458, %3, %cst_85 {dimension_numbers = #tpu.dot_dimension_numbers<[1], [0], [0], [1], [0, 0, 1, 1], [], []>} : vector<1x32xbf16>, vector<32x128xbf16>, vector<1x128xf32> -> vector<1x128xf32>
    %460 = arith.addf %459, %7 : vector<1x128xf32>
    %cst_86 = arith.constant 2.000000e-01 : f32
    %461 = vector.broadcast %cst_86 : f32 to vector<1x128xf32>
    %462 = arith.mulf %460, %461 : vector<1x128xf32>
    %463 = math.tanh %462 : vector<1x128xf32>
    %cst_87 = arith.constant 2.500000e+00 : f32
    %464 = vector.broadcast %cst_87 : f32 to vector<1x128xf32>
    %465 = arith.mulf %464, %463 : vector<1x128xf32>
    %cst_88 = arith.constant -1.000000e+30 : f32
    %466 = vector.broadcast %cst_88 : f32 to vector<1x128xf32>
    %467 = arith.select %12, %465, %466 : vector<1x128xi1>, vector<1x128xf32>
    %cst_89 = arith.constant dense<0xFF800000> : vector<1xf32>
    %468 = vector.multi_reduction <maximumf>, %467, %cst_89 [1] : vector<1x128xf32> to vector<1xf32>
    %469 = vector.shape_cast %468 : vector<1xf32> to vector<1x1xf32>
    %470 = vector.broadcast %469 : vector<1x1xf32> to vector<1x128xf32>
    %471 = arith.subf %467, %470 : vector<1x128xf32>
    %472 = math.exp %471 : vector<1x128xf32>
    %cst_90 = arith.constant dense<0.000000e+00> : vector<1xf32>
    %473 = vector.multi_reduction <add>, %472, %cst_90 [1] : vector<1x128xf32> to vector<1xf32>
    %474 = vector.shape_cast %473 : vector<1xf32> to vector<1x1xf32>
    %475 = math.log %474 : vector<1x1xf32>
    %476 = vector.broadcast %475 : vector<1x1xf32> to vector<1x128xf32>
    %477 = arith.subf %471, %476 : vector<1x128xf32>
    %478 = tpu.reciprocal %474 {approx = true} : vector<1x1xf32> -> vector<1x1xf32>
    %479 = vector.broadcast %478 : vector<1x1xf32> to vector<1x128xf32>
    %480 = arith.mulf %472, %479 : vector<1x128xf32>
    %481 = arith.mulf %480, %477 : vector<1x128xf32>
    %cst_91 = arith.constant 0.000000e+00 : f32
    %482 = vector.broadcast %cst_91 : f32 to vector<1x128xf32>
    %483 = arith.select %12, %481, %482 : vector<1x128xi1>, vector<1x128xf32>
    %cst_92 = arith.constant dense<0.000000e+00> : vector<1xf32>
    %484 = vector.multi_reduction <add>, %483, %cst_92 [1] : vector<1x128xf32> to vector<1xf32>
    %485 = vector.shape_cast %484 : vector<1xf32> to vector<1x1xf32>
    %486 = arith.subf %386, %485 : vector<1x1xf32>
    %487 = vector.extract_strided_slice %9 {offsets = [4, 0], sizes = [1, 128], strides = [1, 1]} : vector<6x128xf32> to vector<1x128xf32>
    %488 = arith.addf %467, %487 : vector<1x128xf32>
    %cst_93 = arith.constant dense<0xFF800000> : vector<1xf32>
    %489 = vector.multi_reduction <maximumf>, %488, %cst_93 [1] : vector<1x128xf32> to vector<1xf32>
    %490 = vector.shape_cast %489 : vector<1xf32> to vector<1x1xf32>
    %491 = vector.broadcast %490 : vector<1x1xf32> to vector<1x128xf32>
    %492 = arith.cmpf oge, %488, %491 : vector<1x128xf32>
    %c128_i32_94 = arith.constant 128 : i32
    %493 = vector.broadcast %c128_i32_94 : i32 to vector<1x128xi32>
    %494 = arith.select %492, %10, %493 : vector<1x128xi1>, vector<1x128xi32>
    %cst_95 = arith.constant dense<2147483647> : vector<1xi32>
    %495 = vector.multi_reduction <minsi>, %494, %cst_95 [1] : vector<1x128xi32> to vector<1xi32>
    %496 = vector.shape_cast %495 : vector<1xi32> to vector<1x1xi32>
    %497 = vector.broadcast %496 : vector<1x1xi32> to vector<1x128xi32>
    %498 = arith.cmpi eq, %10, %497 : vector<1x128xi32>
    %499 = arith.extui %498 : vector<1x128xi1> to vector<1x128xi32>
    %500 = arith.sitofp %499 : vector<1x128xi32> to vector<1x128xf32>
    %501 = arith.mulf %500, %477 : vector<1x128xf32>
    %cst_96 = arith.constant dense<0.000000e+00> : vector<1xf32>
    %502 = vector.multi_reduction <add>, %501, %cst_96 [1] : vector<1x128xf32> to vector<1xf32>
    %503 = vector.shape_cast %502 : vector<1xf32> to vector<1x1xf32>
    %504 = arith.addf %404, %503 : vector<1x1xf32>
    %505 = arith.sitofp %496 : vector<1x1xi32> to vector<1x1xf32>
    %c6_i32 = arith.constant 6 : i32
    %506 = vector.broadcast %c6_i32 : i32 to vector<1x128xi32>
    %507 = arith.cmpi eq, %10, %506 : vector<1x128xi32>
    %508 = arith.extui %507 : vector<1x128xi1> to vector<1x128xi32>
    %509 = arith.sitofp %508 : vector<1x128xi32> to vector<1x128xf32>
    %510 = vector.broadcast %505 : vector<1x1xf32> to vector<1x128xf32>
    %511 = arith.mulf %510, %509 : vector<1x128xf32>
    %512 = arith.addf %412, %511 : vector<1x128xf32>
    %513 = vector.broadcast %496 : vector<1x1xi32> to vector<5x1xi32>
    %514 = arith.cmpi eq, %13, %513 : vector<5x1xi32>
    %cst_97 = arith.constant 0.000000e+00 : f32
    %515 = vector.shape_cast %514 : vector<5x1xi1> to vector<5x1xi1>
    %516 = vector.broadcast %515 : vector<5x1xi1> to vector<5x128xi1>
    %517 = vector.broadcast %cst_97 : f32 to vector<5x128xf32>
    %518 = arith.select %516, %8, %517 : vector<5x128xi1>, vector<5x128xf32>
    %cst_98 = arith.constant dense<0.000000e+00> : vector<128xf32>
    %519 = vector.multi_reduction <add>, %518, %cst_98 [0] : vector<5x128xf32> to vector<128xf32>
    %520 = vector.shape_cast %519 : vector<128xf32> to vector<1x128xf32>
    %521 = arith.truncf %438 : vector<1x32xf32> to vector<1x32xbf16>
    %cst_99 = arith.constant dense<0.000000e+00> : vector<1x128xf32>
    %522 = tpu.matmul %521, %2, %cst_99 {dimension_numbers = #tpu.dot_dimension_numbers<[1], [0], [0], [1], [0, 0, 1, 1], [], []>} : vector<1x32xbf16>, vector<32x128xbf16>, vector<1x128xf32> -> vector<1x128xf32>
    %523 = arith.addf %520, %522 : vector<1x128xf32>
    %524 = arith.negf %523 : vector<1x128xf32>
    %525 = math.exp %524 : vector<1x128xf32>
    %cst_100 = arith.constant 1.000000e+00 : f32
    %526 = vector.broadcast %cst_100 : f32 to vector<1x128xf32>
    %527 = arith.addf %526, %525 : vector<1x128xf32>
    %528 = arith.divf %526, %527 : vector<1x128xf32>
    %529 = math.tanh %523 : vector<1x128xf32>
    %530 = vector.extract_strided_slice %528 {offsets = [0, 0], sizes = [1, 32], strides = [1, 1]} : vector<1x128xf32> to vector<1x32xf32>
    %531 = vector.extract_strided_slice %528 {offsets = [0, 32], sizes = [1, 32], strides = [1, 1]} : vector<1x128xf32> to vector<1x32xf32>
    %532 = vector.extract_strided_slice %529 {offsets = [0, 64], sizes = [1, 32], strides = [1, 1]} : vector<1x128xf32> to vector<1x32xf32>
    %533 = vector.extract_strided_slice %528 {offsets = [0, 96], sizes = [1, 32], strides = [1, 1]} : vector<1x128xf32> to vector<1x32xf32>
    %534 = arith.mulf %531, %436 : vector<1x32xf32>
    %535 = arith.mulf %530, %532 : vector<1x32xf32>
    %536 = arith.addf %534, %535 : vector<1x32xf32>
    %537 = math.tanh %536 : vector<1x32xf32>
    %538 = arith.mulf %533, %537 : vector<1x32xf32>
    %539 = tpu.concatenate %538, %457 in 1 : vector<1x32xf32>, vector<1x32xf32> -> vector<1x64xf32>
    %540 = arith.truncf %539 : vector<1x64xf32> to vector<1x64xbf16>
    %cst_101 = arith.constant dense<0.000000e+00> : vector<1x128xf32>
    %541 = tpu.matmul %540, %1, %cst_101 {dimension_numbers = #tpu.dot_dimension_numbers<[1], [0], [0], [1], [0, 0, 1, 1], [], []>} : vector<1x64xbf16>, vector<64x128xbf16>, vector<1x128xf32> -> vector<1x128xf32>
    %542 = arith.addf %541, %6 : vector<1x128xf32>
    %543 = arith.negf %542 : vector<1x128xf32>
    %544 = math.exp %543 : vector<1x128xf32>
    %cst_102 = arith.constant 1.000000e+00 : f32
    %545 = vector.broadcast %cst_102 : f32 to vector<1x128xf32>
    %546 = arith.addf %545, %544 : vector<1x128xf32>
    %547 = arith.divf %545, %546 : vector<1x128xf32>
    %548 = math.tanh %542 : vector<1x128xf32>
    %549 = vector.extract_strided_slice %547 {offsets = [0, 0], sizes = [1, 32], strides = [1, 1]} : vector<1x128xf32> to vector<1x32xf32>
    %550 = vector.extract_strided_slice %547 {offsets = [0, 32], sizes = [1, 32], strides = [1, 1]} : vector<1x128xf32> to vector<1x32xf32>
    %551 = vector.extract_strided_slice %548 {offsets = [0, 64], sizes = [1, 32], strides = [1, 1]} : vector<1x128xf32> to vector<1x32xf32>
    %552 = vector.extract_strided_slice %547 {offsets = [0, 96], sizes = [1, 32], strides = [1, 1]} : vector<1x128xf32> to vector<1x32xf32>
    %553 = arith.mulf %550, %455 : vector<1x32xf32>
    %554 = arith.mulf %549, %551 : vector<1x32xf32>
    %555 = arith.addf %553, %554 : vector<1x32xf32>
    %556 = math.tanh %555 : vector<1x32xf32>
    %557 = arith.mulf %552, %556 : vector<1x32xf32>
    %558 = arith.truncf %557 : vector<1x32xf32> to vector<1x32xbf16>
    %cst_103 = arith.constant dense<0.000000e+00> : vector<1x128xf32>
    %559 = tpu.matmul %558, %3, %cst_103 {dimension_numbers = #tpu.dot_dimension_numbers<[1], [0], [0], [1], [0, 0, 1, 1], [], []>} : vector<1x32xbf16>, vector<32x128xbf16>, vector<1x128xf32> -> vector<1x128xf32>
    %560 = arith.addf %559, %7 : vector<1x128xf32>
    %cst_104 = arith.constant 2.000000e-01 : f32
    %561 = vector.broadcast %cst_104 : f32 to vector<1x128xf32>
    %562 = arith.mulf %560, %561 : vector<1x128xf32>
    %563 = math.tanh %562 : vector<1x128xf32>
    %cst_105 = arith.constant 2.500000e+00 : f32
    %564 = vector.broadcast %cst_105 : f32 to vector<1x128xf32>
    %565 = arith.mulf %564, %563 : vector<1x128xf32>
    %cst_106 = arith.constant -1.000000e+30 : f32
    %566 = vector.broadcast %cst_106 : f32 to vector<1x128xf32>
    %567 = arith.select %12, %565, %566 : vector<1x128xi1>, vector<1x128xf32>
    %cst_107 = arith.constant dense<0xFF800000> : vector<1xf32>
    %568 = vector.multi_reduction <maximumf>, %567, %cst_107 [1] : vector<1x128xf32> to vector<1xf32>
    %569 = vector.shape_cast %568 : vector<1xf32> to vector<1x1xf32>
    %570 = vector.broadcast %569 : vector<1x1xf32> to vector<1x128xf32>
    %571 = arith.subf %567, %570 : vector<1x128xf32>
    %572 = math.exp %571 : vector<1x128xf32>
    %cst_108 = arith.constant dense<0.000000e+00> : vector<1xf32>
    %573 = vector.multi_reduction <add>, %572, %cst_108 [1] : vector<1x128xf32> to vector<1xf32>
    %574 = vector.shape_cast %573 : vector<1xf32> to vector<1x1xf32>
    %575 = math.log %574 : vector<1x1xf32>
    %576 = vector.broadcast %575 : vector<1x1xf32> to vector<1x128xf32>
    %577 = arith.subf %571, %576 : vector<1x128xf32>
    %578 = tpu.reciprocal %574 {approx = true} : vector<1x1xf32> -> vector<1x1xf32>
    %579 = vector.broadcast %578 : vector<1x1xf32> to vector<1x128xf32>
    %580 = arith.mulf %572, %579 : vector<1x128xf32>
    %581 = arith.mulf %580, %577 : vector<1x128xf32>
    %cst_109 = arith.constant 0.000000e+00 : f32
    %582 = vector.broadcast %cst_109 : f32 to vector<1x128xf32>
    %583 = arith.select %12, %581, %582 : vector<1x128xi1>, vector<1x128xf32>
    %cst_110 = arith.constant dense<0.000000e+00> : vector<1xf32>
    %584 = vector.multi_reduction <add>, %583, %cst_110 [1] : vector<1x128xf32> to vector<1xf32>
    %585 = vector.shape_cast %584 : vector<1xf32> to vector<1x1xf32>
    %586 = arith.subf %486, %585 : vector<1x1xf32>
    %587 = vector.extract_strided_slice %9 {offsets = [5, 0], sizes = [1, 128], strides = [1, 1]} : vector<6x128xf32> to vector<1x128xf32>
    %588 = arith.addf %567, %587 : vector<1x128xf32>
    %cst_111 = arith.constant dense<0xFF800000> : vector<1xf32>
    %589 = vector.multi_reduction <maximumf>, %588, %cst_111 [1] : vector<1x128xf32> to vector<1xf32>
    %590 = vector.shape_cast %589 : vector<1xf32> to vector<1x1xf32>
    %591 = vector.broadcast %590 : vector<1x1xf32> to vector<1x128xf32>
    %592 = arith.cmpf oge, %588, %591 : vector<1x128xf32>
    %c128_i32_112 = arith.constant 128 : i32
    %593 = vector.broadcast %c128_i32_112 : i32 to vector<1x128xi32>
    %594 = arith.select %592, %10, %593 : vector<1x128xi1>, vector<1x128xi32>
    %cst_113 = arith.constant dense<2147483647> : vector<1xi32>
    %595 = vector.multi_reduction <minsi>, %594, %cst_113 [1] : vector<1x128xi32> to vector<1xi32>
    %596 = vector.shape_cast %595 : vector<1xi32> to vector<1x1xi32>
    %597 = vector.broadcast %596 : vector<1x1xi32> to vector<1x128xi32>
    %598 = arith.cmpi eq, %10, %597 : vector<1x128xi32>
    %599 = arith.extui %598 : vector<1x128xi1> to vector<1x128xi32>
    %600 = arith.sitofp %599 : vector<1x128xi32> to vector<1x128xf32>
    %601 = arith.mulf %600, %577 : vector<1x128xf32>
    %cst_114 = arith.constant dense<0.000000e+00> : vector<1xf32>
    %602 = vector.multi_reduction <add>, %601, %cst_114 [1] : vector<1x128xf32> to vector<1xf32>
    %603 = vector.shape_cast %602 : vector<1xf32> to vector<1x1xf32>
    %604 = arith.addf %504, %603 : vector<1x1xf32>
    %605 = arith.sitofp %596 : vector<1x1xi32> to vector<1x1xf32>
    %c7_i32 = arith.constant 7 : i32
    %606 = vector.broadcast %c7_i32 : i32 to vector<1x128xi32>
    %607 = arith.cmpi eq, %10, %606 : vector<1x128xi32>
    %608 = arith.extui %607 : vector<1x128xi1> to vector<1x128xi32>
    %609 = arith.sitofp %608 : vector<1x128xi32> to vector<1x128xf32>
    %610 = vector.broadcast %605 : vector<1x1xf32> to vector<1x128xf32>
    %611 = arith.mulf %610, %609 : vector<1x128xf32>
    %612 = arith.addf %512, %611 : vector<1x128xf32>
    %c0_i32 = arith.constant 0 : i32
    %613 = vector.broadcast %c0_i32 : i32 to vector<1x128xi32>
    %614 = arith.cmpi eq, %10, %613 : vector<1x128xi32>
    %615 = arith.extui %614 : vector<1x128xi1> to vector<1x128xi32>
    %616 = arith.sitofp %615 : vector<1x128xi32> to vector<1x128xf32>
    %617 = vector.broadcast %604 : vector<1x1xf32> to vector<1x128xf32>
    %618 = arith.mulf %617, %616 : vector<1x128xf32>
    %619 = arith.addf %612, %618 : vector<1x128xf32>
    %c1_i32 = arith.constant 1 : i32
    %620 = vector.broadcast %c1_i32 : i32 to vector<1x128xi32>
    %621 = arith.cmpi eq, %10, %620 : vector<1x128xi32>
    %622 = arith.extui %621 : vector<1x128xi1> to vector<1x128xi32>
    %623 = arith.sitofp %622 : vector<1x128xi32> to vector<1x128xf32>
    %624 = vector.broadcast %586 : vector<1x1xf32> to vector<1x128xf32>
    %625 = arith.mulf %624, %623 : vector<1x128xf32>
    %626 = arith.addf %619, %625 : vector<1x128xf32>
    %c0_115 = arith.constant 0 : index
    %c0_116 = arith.constant 0 : index
    %627 = vector.load %arg2[%c0_115, %c0_116] : memref<1x128xf32, #tpu.memory_space<vmem>>, vector<1x128xf32>
    tpu.vector_store %arg2[%c0_115, %c0_116], %626 {strides = array<i32>} : memref<1x128xf32, #tpu.memory_space<vmem>>, vector<1x128xf32>,
    return
  }
}

</mosaic_0001>

<llo_original>
// kernel: controller_forward.1
$region0: #{controller_forward.1}
  #allocation0 [shape = 'u32[]', space=smem, size = 0x4, offset = 0x4, fixed_abs, tag = 'smem constant byte address 0x4 - core index']
  #allocation1 [shape = 'u32[144,128]{1,0:T(1,128)}', space=vmem, size = 0x12000, scoped, tag = 'internal scratch']
  %s0 = inlined_call_operand.hbm [shape: bf16[128,128], index: 0, kind: input, shape index: {}]
  %s1 = inlined_call_operand.hbm [shape: f32[24,128], index: 1, kind: input, shape index: {}]
  %s2 = inlined_call_operand.vmem [shape: f32[1,128], index: 2, kind: output, shape index: {}]
  %s3 = sld [smem:[#allocation0]]
  $region26: #{controller_forward.1} parent=0
    _
  %s5 = ssub.s32 1, %s3
  %s6 = scalar_select 0, %s5, %s3
  $region1: #{controller_forward.1} parent=0
    #allocation2 [shape = 'u8[32768]{0}', space=vmem, size = 0x8000, scoped, tag = 'input window, operand 0, single buffered']
    #allocation3 [shape = 's32[1]{0}', space=sflag, size = 0x4, scoped, tag = 'scoped memory for controller_forward.1']
    #allocation4 [shape = 'u8[12288]{0}', space=vmem, size = 0x3000, scoped, tag = 'input window, operand 1, single buffered']
    #allocation5 [shape = 's32[1]{0}', space=sflag, size = 0x4, scoped, tag = 'scoped memory for controller_forward.1']
    %7 = vsyncpa [#allocation3], 0
    %8 = vsyncpa [#allocation5], 0
    // Predicated region
    $region2: #{controller_forward.1} parent=1 // pred_check
      _
    $region3: #{controller_forward.1} parent=1 // pred_check_branch
      %10 = sbr.rel (0) target = $region5
    $region4: #{controller_forward.1} parent=1 // pred_region
      %s12 = ssub.s32 1024, 1024
      %13 = vsyncadd [#allocation3], %s12
      %s14 = sshll.u32 [#allocation2], 4
      %s15 = int_to_ptr.vmem [resolvable:$true] %s14
      %20 = dma.hbm_to_vmem [thread:$0]  %s0, 1024, %s15, [#allocation3], 64, 64, 4
    $region5: #{controller_forward.1} parent=1 // pred_fallthru
      _
    // Predicated region
    $region6: #{controller_forward.1} parent=1 // pred_check
      _
    $region7: #{controller_forward.1} parent=1 // pred_check_branch
      %22 = sbr.rel (0) target = $region9
    $region8: #{controller_forward.1} parent=1 // pred_region
      %s24 = ssub.s32 384, 384
      %25 = vsyncadd [#allocation5], %s24
      %s26 = sshll.u32 [#allocation4], 4
      %s27 = int_to_ptr.vmem [resolvable:$true] %s26
      %32 = dma.hbm_to_vmem [thread:$0]  %s1, 384, %s27, [#allocation5], 128, 128, 8
    $region9: #{controller_forward.1} parent=1 // pred_fallthru
      _
    // Predicated region
    $region10: #{controller_forward.1} parent=1 // pred_check
      _
    $region11: #{controller_forward.1} parent=1 // pred_check_branch
      %34 = sbr.rel (0) target = $region13
    $region12: #{controller_forward.1} parent=1 // pred_region
      %35 = dma.done [#allocation3], 1024
    $region13: #{controller_forward.1} parent=1 // pred_fallthru
      _
    // Predicated region
    $region14: #{controller_forward.1} parent=1 // pred_check
      _
    $region15: #{controller_forward.1} parent=1 // pred_check_branch
      %37 = sbr.rel (0) target = $region17
    $region16: #{controller_forward.1} parent=1 // pred_region
      %38 = dma.done [#allocation5], 384
    $region17: #{controller_forward.1} parent=1 // pred_fallthru
      _
    %v40 = vld [vmem:[#allocation2] sm:$0xf]
    %v41 = vld [vmem:[#allocation2 + $0x4] sm:$0xf]
    %v42 = vld [vmem:[#allocation2 + $0x8] sm:$0xf]
    %v43 = vld [vmem:[#allocation2 + $0xc] sm:$0xf]
    %v44 = vld [vmem:[#allocation2 + $0x10] sm:$0xf]
    %v45 = vld [vmem:[#allocation2 + $0x14] sm:$0xf]
    %v46 = vld [vmem:[#allocation2 + $0x18] sm:$0xf]
    %v47 = vld [vmem:[#allocation2 + $0x1c] sm:$0xf]
    %v48 = vld [vmem:[#allocation2 + $0x20] sm:$0xf]
    %v49 = vld [vmem:[#allocation2 + $0x24] sm:$0xf]
    %v50 = vld [vmem:[#allocation2 + $0x28] sm:$0xf]
    %v51 = vld [vmem:[#allocation2 + $0x2c] sm:$0xf]
    %v52 = vld [vmem:[#allocation2 + $0x30] sm:$0xf]
    %v53 = vld [vmem:[#allocation2 + $0x34] sm:$0xf]
    %v54 = vld [vmem:[#allocation2 + $0x38] sm:$0xf]
    %v55 = vld [vmem:[#allocation2 + $0x3c] sm:$0xf]
    %v56 = vld [vmem:[#allocation4] sm:$0xff]
    %v57 = vld [vmem:[#allocation4 + $0x8] sm:$0xff]
    %v58 = vld [vmem:[#allocation4 + $0x10] sm:$0xff]
    %v59 = vlaneseq
    %v60 = vand.u32 %v59, 127
    %vm61 = vcmp.lt.s32.totalorder %v60, 5
    %v62 = vlaneseq
    %v63 = vshrl.u32 %v62, 7
    %v68 = vunpack.c.l.b16 %v48
    %v69 = vunpack.c.l.b16 %v49
    %v70 = vunpack.c.l.b16 %v50
    %v71 = vunpack.c.l.b16 %v51
    %v72 = vpack.c.b16 %v69, %v68
    %v73 = vpack.c.b16 %v71, %v70
    %vm76 = vcmask 261120
    %v78 = vsel %vm76, 0, 0
    %80 = vmatprep.subr.bf16.mxu0 0
    %81 = vmatpush1.bf16.msra.mxu0 %v72
    %82 = vmatprep.subr.bf16.mxu0 0
    %83 = vmatpush1.bf16.msra.mxu0 %v73
    %84 = vmatprep.subr.bf16.mxu0 0
    %85 = vmatpush1.bf16.msra.mxu0 0
    %86 = vmatprep.subr.bf16.mxu0 0
    %87 = vmatpush1.bf16.msra.mxu0 0
    %88 = vmatprep.subr.bf16.mxu0 0
    %89 = vmatpush1.bf16.msra.mxu0 0
    %90 = vmatprep.subr.bf16.mxu0 0
    %91 = vmatpush1.bf16.msra.mxu0 0
    %92 = vmatprep.subr.bf16.mxu0 0
    %93 = vmatpush1.bf16.msra.mxu0 0
    %94 = vmatprep.subr.bf16.mxu0 0
    %95 = vmatpush1.bf16.msra.mxu0 0
    %96 = vmatprep.subr.bf16.mxu0 0
    %97 = vmatpush1.bf16.msra.mxu0 0
    %98 = vmatprep.subr.bf16.mxu0 0
    %99 = vmatpush1.bf16.msra.mxu0 0
    %100 = vmatprep.subr.bf16.mxu0 0
    %101 = vmatpush1.bf16.msra.mxu0 0
    %102 = vmatprep.subr.bf16.mxu0 0
    %103 = vmatpush1.bf16.msra.mxu0 0
    %104 = vmatprep.subr.bf16.mxu0 0
    %105 = vmatpush1.bf16.msra.mxu0 0
    %106 = vmatprep.subr.bf16.mxu0 0
    %107 = vmatpush1.bf16.msra.mxu0 0
    %108 = vmatprep.subr.bf16.mxu0 0
    %109 = vmatpush1.bf16.msra.mxu0 0
    %110 = vmatprep.subr.bf16.mxu0 0
    %111 = vmatpush1.bf16.msra.mxu0 0
    %112 = vmatprep.mubr.bf16.mxu0 0
    %113 = vmatmul.mubr.bf16.gmra.mrb[0].mxu0 %v78
    %v114 = vpop.f32.mrb[0].mxu0
    %v115 = vadd.f32 0.0, %v114
    %v116 = vpop.f32.mrb[0].mxu0
    %v117 = vpop.f32.mrb[0].mxu0
    %v118 = vpop.f32.mrb[0].mxu0
    %119 = vdwg.mxu0
    %v120 = vadd.f32 %v56, %v115
    %v121 = vxor.u32 %v120, 2147483648
    %v122 = vmul.f32 %v121, 1.442695
    %v123 = vpow.pop %v122
    %v124 = vadd.f32 %v123, 1.0
    %v125 = vrcp.pop %v124
    %v126 = vmul.f32 1.0, %v125
    %v127 = vtanh.pop %v120
    %v128 = vmul.f32 %v126, 0.0
    %130 = vrot.lane.b32.xlu0 %v127, 64
    %v131 = vpop.permute.xlu0 %130
    %v133 = vmul.f32 %v126, %v131
    %135 = vrot.lane.b32.xlu0 %v133, 32
    %v136 = vpop.permute.xlu0 %135
    %v138 = vadd.f32 %v128, %v136
    %v139 = vtanh.pop %v138
    %141 = vrot.lane.b32.xlu0 %v139, 64
    %v142 = vpop.permute.xlu0 %141
    %v144 = vmul.f32 %v126, %v142
    %146 = vrot.lane.b32.xlu0 %v144, 32
    %v147 = vpop.permute.xlu0 %146
    %v149 = vsel %vm76, %v147, 0.0
    %v150 = vpack.c.bf16 %v149, %v149
    %v159 = vunpack.c.l.b16 %v40
    %v160 = vunpack.c.l.b16 %v41
    %v161 = vunpack.c.l.b16 %v42
    %v162 = vunpack.c.l.b16 %v43
    %v163 = vunpack.c.l.b16 %v44
    %v164 = vunpack.c.l.b16 %v45
    %v165 = vunpack.c.l.b16 %v46
    %v166 = vunpack.c.l.b16 %v47
    %v167 = vpack.c.b16 %v160, %v159
    %v168 = vpack.c.b16 %v162, %v161
    %v169 = vpack.c.b16 %v164, %v163
    %v170 = vpack.c.b16 %v166, %v165
    %v176 = vrot.slane %v56, 1
    %vm178 = vcmask 523264
    %v180 = vsel %vm178, %v150, 0
    %182 = vmatprep.subr.bf16.mxu0 0
    %183 = vmatpush1.bf16.msra.mxu0 %v167
    %184 = vmatprep.subr.bf16.mxu0 0
    %185 = vmatpush1.bf16.msra.mxu0 %v168
    %186 = vmatprep.subr.bf16.mxu0 0
    %187 = vmatpush1.bf16.msra.mxu0 %v169
    %188 = vmatprep.subr.bf16.mxu0 0
    %189 = vmatpush1.bf16.msra.mxu0 %v170
    %190 = vmatprep.subr.bf16.mxu0 0
    %191 = vmatpush1.bf16.msra.mxu0 0
    %192 = vmatprep.subr.bf16.mxu0 0
    %193 = vmatpush1.bf16.msra.mxu0 0
    %194 = vmatprep.subr.bf16.mxu0 0
    %195 = vmatpush1.bf16.msra.mxu0 0
    %196 = vmatprep.subr.bf16.mxu0 0
    %197 = vmatpush1.bf16.msra.mxu0 0
    %198 = vmatprep.subr.bf16.mxu0 0
    %199 = vmatpush1.bf16.msra.mxu0 0
    %200 = vmatprep.subr.bf16.mxu0 0
    %201 = vmatpush1.bf16.msra.mxu0 0
    %202 = vmatprep.subr.bf16.mxu0 0
    %203 = vmatpush1.bf16.msra.mxu0 0
    %204 = vmatprep.subr.bf16.mxu0 0
    %205 = vmatpush1.bf16.msra.mxu0 0
    %206 = vmatprep.subr.bf16.mxu0 0
    %207 = vmatpush1.bf16.msra.mxu0 0
    %208 = vmatprep.subr.bf16.mxu0 0
    %209 = vmatpush1.bf16.msra.mxu0 0
    %210 = vmatprep.subr.bf16.mxu0 0
    %211 = vmatpush1.bf16.msra.mxu0 0
    %212 = vmatprep.subr.bf16.mxu0 0
    %213 = vmatpush1.bf16.msra.mxu0 0
    %214 = vmatprep.mubr.bf16.mxu0 0
    %215 = vmatmul.mubr.bf16.gmra.mrb[0].mxu0 %v180
    %v216 = vpop.f32.mrb[0].mxu0
    %v217 = vadd.f32 %v176, %v216
    %v218 = vpop.f32.mrb[0].mxu0
    %v219 = vpop.f32.mrb[0].mxu0
    %v220 = vpop.f32.mrb[0].mxu0
    %221 = vdwg.mxu0
    %v222 = vxor.u32 %v217, 2147483648
    %v223 = vmul.f32 %v222, 1.442695
    %v224 = vpow.pop %v223
    %v225 = vadd.f32 %v224, 1.0
    %v226 = vrcp.pop %v225
    %v227 = vmul.f32 1.0, %v226
    %v228 = vtanh.pop %v217
    %v229 = vmul.f32 %v227, 0.0
    %231 = vrot.lane.b32.xlu0 %v228, 64
    %v232 = vpop.permute.xlu0 %231
    %v234 = vmul.f32 %v227, %v232
    %236 = vrot.lane.b32.xlu0 %v234, 32
    %v237 = vpop.permute.xlu0 %236
    %v239 = vadd.f32 %v229, %v237
    %v240 = vtanh.pop %v239
    %242 = vrot.lane.b32.xlu0 %v240, 64
    %v243 = vpop.permute.xlu0 %242
    %v245 = vmul.f32 %v227, %v243
    %v246 = vpack.c.bf16 %v245, %v245
    %248 = vrot.lane.b32.xlu0 %v246, 32
    %v249 = vpop.permute.xlu0 %248
    %v254 = vunpack.c.l.b16 %v52
    %v255 = vunpack.c.l.b16 %v53
    %v256 = vunpack.c.l.b16 %v54
    %v257 = vunpack.c.l.b16 %v55
    %v258 = vpack.c.b16 %v255, %v254
    %v259 = vpack.c.b16 %v257, %v256
    %v262 = vrot.slane %v56, 2
    %v265 = vsel %vm76, %v249, 0
    %267 = vmatprep.subr.bf16.mxu0 0
    %268 = vmatpush1.bf16.msra.mxu0 %v258
    %269 = vmatprep.subr.bf16.mxu0 0
    %270 = vmatpush1.bf16.msra.mxu0 %v259
    %271 = vmatprep.subr.bf16.mxu0 0
    %272 = vmatpush1.bf16.msra.mxu0 0
    %273 = vmatprep.subr.bf16.mxu0 0
    %274 = vmatpush1.bf16.msra.mxu0 0
    %275 = vmatprep.subr.bf16.mxu0 0
    %276 = vmatpush1.bf16.msra.mxu0 0
    %277 = vmatprep.subr.bf16.mxu0 0
    %278 = vmatpush1.bf16.msra.mxu0 0
    %279 = vmatprep.subr.bf16.mxu0 0
    %280 = vmatpush1.bf16.msra.mxu0 0
    %281 = vmatprep.subr.bf16.mxu0 0
    %282 = vmatpush1.bf16.msra.mxu0 0
    %283 = vmatprep.subr.bf16.mxu0 0
    %284 = vmatpush1.bf16.msra.mxu0 0
    %285 = vmatprep.subr.bf16.mxu0 0
    %286 = vmatpush1.bf16.msra.mxu0 0
    %287 = vmatprep.subr.bf16.mxu0 0
    %288 = vmatpush1.bf16.msra.mxu0 0
    %289 = vmatprep.subr.bf16.mxu0 0
    %290 = vmatpush1.bf16.msra.mxu0 0
    %291 = vmatprep.subr.bf16.mxu0 0
    %292 = vmatpush1.bf16.msra.mxu0 0
    %293 = vmatprep.subr.bf16.mxu0 0
    %294 = vmatpush1.bf16.msra.mxu0 0
    %295 = vmatprep.subr.bf16.mxu0 0
    %296 = vmatpush1.bf16.msra.mxu0 0
    %297 = vmatprep.subr.bf16.mxu0 0
    %298 = vmatpush1.bf16.msra.mxu0 0
    %299 = vmatprep.mubr.bf16.mxu0 0
    %300 = vmatmul.mubr.bf16.gmra.mrb[0].mxu0 %v265
    %v301 = vpop.f32.mrb[0].mxu0
    %v302 = vadd.f32 %v262, %v301
    %v303 = vpop.f32.mrb[0].mxu0
    %v304 = vpop.f32.mrb[0].mxu0
    %v305 = vpop.f32.mrb[0].mxu0
    %306 = vdwg.mxu0
    %v307 = vmul.f32 %v302, 0.2
    %v308 = vtanh.pop %v307
    %v309 = vmul.f32 %v308, 2.5
    %v310 = vsel %vm61, %v309, -1e+30
    %vm311 = vcmask 1040384
    %v312 = vsel %vm311, %v310, -inf
    %313 = vmax.xlane.f32.xlu0 %v312
    %v314 = vpop.xlane.xlu0 %313
    %v315 = vsub.f32 %v310, %v314
    %v316 = vmul.f32 %v315, 1.442695
    %v317 = vpow.pop %v316
    %v318 = vsel %vm311, %v317, 0.0
    %319 = vadd.xlane.f32.xlu0 %v318
    %v320 = vpop.xlane.xlu0 %319
    %v321 = vlog2.pop %v320
    %v322 = vmul.f32 %v321, 0.6931472
    %v323 = vsub.f32 %v315, %v322
    %v324 = vrcp.pop %v320
    %v325 = vmul.f32 %v317, %v324
    %v326 = vmul.f32 %v325, %v323
    %v327 = vsel %vm61, %v326, 0.0
    %v328 = vsel %vm311, %v327, 0.0
    %329 = vadd.xlane.f32.xlu0 %v328
    %v330 = vpop.xlane.xlu0 %329
    %v331 = vsub.f32 0.0, %v330
    %v332 = vadd.f32 %v310, %v58
    %v333 = vsel %vm311, %v332, -inf
    %334 = vmax.xlane.f32.xlu0 %v333
    %v335 = vpop.xlane.xlu0 %334
    %vm336 = vcmp.ge.f32.partialorder %v332, %v335
    %v337 = vsel %vm336, %v60, 128
    %v338 = vsel %vm311, %v337, 2147483647
    %v339 = vand.u32 %v338, 65535
    %v340 = vshra.s32 %v338, 16
    %v341 = vcvt.s32.f32 %v339
    %v342 = vcvt.s32.f32 %v340
    %343 = vmin.xlane.f32.xlu0 %v342
    %v344 = vpop.xlane.xlu0 %343
    %vm345 = vcmp.eq.f32.partialorder %v342, %v344
    %v346 = vsel %vm345, %v341, inf
    %347 = vmin.xlane.f32.xlu0 %v346
    %v348 = vpop.xlane.xlu0 %347
    %v349 = vcvt.f32.s32 %v348
    %v350 = vcvt.f32.s32 %v344
    %v351 = vshll.u32 %v350, 16
    %v352 = vadd.s32 %v351, %v349
    %vm353 = vcmp.eq.s32.totalorder %v60, %v352
    %v354 = vsel %vm353, 1, 0
    %v355 = vcvt.s32.f32 %v354
    %v356 = vmul.f32 %v355, %v323
    %v357 = vsel %vm311, %v356, 0.0
    %358 = vadd.xlane.f32.xlu0 %v357
    %v359 = vpop.xlane.xlu0 %358
    %v360 = vadd.f32 %v359, 0.0
    %v361 = vcvt.s32.f32 %v352
    %vm362 = vcmp.eq.s32.totalorder %v60, 2
    %v363 = vsel %vm362, 1, 0
    %v364 = vcvt.s32.f32 %v363
    %v365 = vmul.f32 %v361, %v364
    %v366 = vadd.f32 %v365, 0.0
    %v367 = vlaneseq
    %v368 = vshrl.u32 %v367, 7
    %v369 = vsub.s32 0, %v368
    %v370 = vrot.slane %v352, %v369
    %vm371 = vcmp.eq.s32.totalorder %v63, %v370
    %v372 = vsel %vm371, 1, 0
    %vm373 = vcmp.eq.s32.totalorder %v372, 1
    %v374 = vsel %vm373, %v57, 0.0
    %vm375 = vcmask 1044480
    %v376 = vsel %vm375, %v374, 0.0
    %v377 = vrot.slane %v376, 4
    %v378 = vadd.f32 %v376, %v377
    %v379 = vrot.slane %v378, 2
    %v380 = vadd.f32 %v378, %v379
    %v381 = vrot.slane %v380, 1
    %v382 = vadd.f32 %v380, %v381
    %v383 = vpack.c.bf16 %v144, %v144
    %385 = vrot.lane.b32.xlu0 %v383, 32
    %v386 = vpop.permute.xlu0 %385
    %v388 = vsel %vm76, %v386, 0
    %390 = vmatprep.subr.bf16.mxu0 0
    %391 = vmatpush1.bf16.msra.mxu0 %v72
    %392 = vmatprep.subr.bf16.mxu0 0
    %393 = vmatpush1.bf16.msra.mxu0 %v73
    %394 = vmatprep.subr.bf16.mxu0 0
    %395 = vmatpush1.bf16.msra.mxu0 0
    %396 = vmatprep.subr.bf16.mxu0 0
    %397 = vmatpush1.bf16.msra.mxu0 0
    %398 = vmatprep.subr.bf16.mxu0 0
    %399 = vmatpush1.bf16.msra.mxu0 0
    %400 = vmatprep.subr.bf16.mxu0 0
    %401 = vmatpush1.bf16.msra.mxu0 0
    %402 = vmatprep.subr.bf16.mxu0 0
    %403 = vmatpush1.bf16.msra.mxu0 0
    %404 = vmatprep.subr.bf16.mxu0 0
    %405 = vmatpush1.bf16.msra.mxu0 0
    %406 = vmatprep.subr.bf16.mxu0 0
    %407 = vmatpush1.bf16.msra.mxu0 0
    %408 = vmatprep.subr.bf16.mxu0 0
    %409 = vmatpush1.bf16.msra.mxu0 0
    %410 = vmatprep.subr.bf16.mxu0 0
    %411 = vmatpush1.bf16.msra.mxu0 0
    %412 = vmatprep.subr.bf16.mxu0 0
    %413 = vmatpush1.bf16.msra.mxu0 0
    %414 = vmatprep.subr.bf16.mxu0 0
    %415 = vmatpush1.bf16.msra.mxu0 0
    %416 = vmatprep.subr.bf16.mxu0 0
    %417 = vmatpush1.bf16.msra.mxu0 0
    %418 = vmatprep.subr.bf16.mxu0 0
    %419 = vmatpush1.bf16.msra.mxu0 0
    %420 = vmatprep.subr.bf16.mxu0 0
    %421 = vmatpush1.bf16.msra.mxu0 0
    %422 = vmatprep.mubr.bf16.mxu0 0
    %423 = vmatmul.mubr.bf16.gmra.mrb[0].mxu0 %v388
    %v424 = vpop.f32.mrb[0].mxu0
    %v425 = vadd.f32 0.0, %v424
    %v426 = vpop.f32.mrb[0].mxu0
    %v427 = vpop.f32.mrb[0].mxu0
    %v428 = vpop.f32.mrb[0].mxu0
    %429 = vdwg.mxu0
    %v430 = vadd.f32 %v382, %v425
    %v431 = vxor.u32 %v430, 2147483648
    %v432 = vmul.f32 %v431, 1.442695
    %v433 = vpow.pop %v432
    %v434 = vadd.f32 %v433, 1.0
    %v435 = vrcp.pop %v434
    %v436 = vmul.f32 1.0, %v435
    %v437 = vtanh.pop %v430
    %v438 = vmul.f32 %v436, %v138
    %440 = vrot.lane.b32.xlu0 %v437, 64
    %v441 = vpop.permute.xlu0 %440
    %v443 = vmul.f32 %v436, %v441
    %445 = vrot.lane.b32.xlu0 %v443, 32
    %v446 = vpop.permute.xlu0 %445
    %v448 = vadd.f32 %v438, %v446
    %v449 = vtanh.pop %v448
    %451 = vrot.lane.b32.xlu0 %v449, 64
    %v452 = vpop.permute.xlu0 %451
    %v454 = vmul.f32 %v436, %v452
    %456 = vrot.lane.b32.xlu0 %v454, 32
    %v457 = vpop.permute.xlu0 %456
    %460 = vrot.lane.b32.xlu0 %v245, 64
    %v461 = vpop.permute.xlu0 %460
    %v463 = vsel %vm76, %v457, %v461
    %v464 = vpack.c.bf16 %v463, %v463
    %v466 = vsel %vm178, %v464, 0
    %468 = vmatprep.subr.bf16.mxu0 0
    %469 = vmatpush1.bf16.msra.mxu0 %v167
    %470 = vmatprep.subr.bf16.mxu0 0
    %471 = vmatpush1.bf16.msra.mxu0 %v168
    %472 = vmatprep.subr.bf16.mxu0 0
    %473 = vmatpush1.bf16.msra.mxu0 %v169
    %474 = vmatprep.subr.bf16.mxu0 0
    %475 = vmatpush1.bf16.msra.mxu0 %v170
    %476 = vmatprep.subr.bf16.mxu0 0
    %477 = vmatpush1.bf16.msra.mxu0 0
    %478 = vmatprep.subr.bf16.mxu0 0
    %479 = vmatpush1.bf16.msra.mxu0 0
    %480 = vmatprep.subr.bf16.mxu0 0
    %481 = vmatpush1.bf16.msra.mxu0 0
    %482 = vmatprep.subr.bf16.mxu0 0
    %483 = vmatpush1.bf16.msra.mxu0 0
    %484 = vmatprep.subr.bf16.mxu0 0
    %485 = vmatpush1.bf16.msra.mxu0 0
    %486 = vmatprep.subr.bf16.mxu0 0
    %487 = vmatpush1.bf16.msra.mxu0 0
    %488 = vmatprep.subr.bf16.mxu0 0
    %489 = vmatpush1.bf16.msra.mxu0 0
    %490 = vmatprep.subr.bf16.mxu0 0
    %491 = vmatpush1.bf16.msra.mxu0 0
    %492 = vmatprep.subr.bf16.mxu0 0
    %493 = vmatpush1.bf16.msra.mxu0 0
    %494 = vmatprep.subr.bf16.mxu0 0
    %495 = vmatpush1.bf16.msra.mxu0 0
    %496 = vmatprep.subr.bf16.mxu0 0
    %497 = vmatpush1.bf16.msra.mxu0 0
    %498 = vmatprep.subr.bf16.mxu0 0
    %499 = vmatpush1.bf16.msra.mxu0 0
    %500 = vmatprep.mubr.bf16.mxu0 0
    %501 = vmatmul.mubr.bf16.gmra.mrb[0].mxu0 %v466
    %v502 = vpop.f32.mrb[0].mxu0
    %v503 = vadd.f32 %v176, %v502
    %v504 = vpop.f32.mrb[0].mxu0
    %v505 = vpop.f32.mrb[0].mxu0
    %v506 = vpop.f32.mrb[0].mxu0
    %507 = vdwg.mxu0
    %v508 = vxor.u32 %v503, 2147483648
    %v509 = vmul.f32 %v508, 1.442695
    %v510 = vpow.pop %v509
    %v511 = vadd.f32 %v510, 1.0
    %v512 = vrcp.pop %v511
    %v513 = vmul.f32 1.0, %v512
    %v514 = vtanh.pop %v503
    %v515 = vmul.f32 %v513, %v239
    %517 = vrot.lane.b32.xlu0 %v514, 64
    %v518 = vpop.permute.xlu0 %517
    %v520 = vmul.f32 %v513, %v518
    %522 = vrot.lane.b32.xlu0 %v520, 32
    %v523 = vpop.permute.xlu0 %522
    %v525 = vadd.f32 %v515, %v523
    %v526 = vtanh.pop %v525
    %528 = vrot.lane.b32.xlu0 %v526, 64
    %v529 = vpop.permute.xlu0 %528
    %v531 = vmul.f32 %v513, %v529
    %v532 = vpack.c.bf16 %v531, %v531
    %534 = vrot.lane.b32.xlu0 %v532, 32
    %v535 = vpop.permute.xlu0 %534
    %v537 = vsel %vm76, %v535, 0
    %539 = vmatprep.subr.bf16.mxu0 0
    %540 = vmatpush1.bf16.msra.mxu0 %v258
    %541 = vmatprep.subr.bf16.mxu0 0
    %542 = vmatpush1.bf16.msra.mxu0 %v259
    %543 = vmatprep.subr.bf16.mxu0 0
    %544 = vmatpush1.bf16.msra.mxu0 0
    %545 = vmatprep.subr.bf16.mxu0 0
    %546 = vmatpush1.bf16.msra.mxu0 0
    %547 = vmatprep.subr.bf16.mxu0 0
    %548 = vmatpush1.bf16.msra.mxu0 0
    %549 = vmatprep.subr.bf16.mxu0 0
    %550 = vmatpush1.bf16.msra.mxu0 0
    %551 = vmatprep.subr.bf16.mxu0 0
    %552 = vmatpush1.bf16.msra.mxu0 0
    %553 = vmatprep.subr.bf16.mxu0 0
    %554 = vmatpush1.bf16.msra.mxu0 0
    %555 = vmatprep.subr.bf16.mxu0 0
    %556 = vmatpush1.bf16.msra.mxu0 0
    %557 = vmatprep.subr.bf16.mxu0 0
    %558 = vmatpush1.bf16.msra.mxu0 0
    %559 = vmatprep.subr.bf16.mxu0 0
    %560 = vmatpush1.bf16.msra.mxu0 0
    %561 = vmatprep.subr.bf16.mxu0 0
    %562 = vmatpush1.bf16.msra.mxu0 0
    %563 = vmatprep.subr.bf16.mxu0 0
    %564 = vmatpush1.bf16.msra.mxu0 0
    %565 = vmatprep.subr.bf16.mxu0 0
    %566 = vmatpush1.bf16.msra.mxu0 0
    %567 = vmatprep.subr.bf16.mxu0 0
    %568 = vmatpush1.bf16.msra.mxu0 0
    %569 = vmatprep.subr.bf16.mxu0 0
    %570 = vmatpush1.bf16.msra.mxu0 0
    %571 = vmatprep.mubr.bf16.mxu0 0
    %572 = vmatmul.mubr.bf16.gmra.mrb[0].mxu0 %v537
    %v573 = vpop.f32.mrb[0].mxu0
    %v574 = vadd.f32 %v262, %v573
    %v575 = vpop.f32.mrb[0].mxu0
    %v576 = vpop.f32.mrb[0].mxu0
    %v577 = vpop.f32.mrb[0].mxu0
    %578 = vdwg.mxu0
    %v579 = vmul.f32 %v574, 0.2
    %v580 = vtanh.pop %v579
    %v581 = vmul.f32 %v580, 2.5
    %v582 = vsel %vm61, %v581, -1e+30
    %v583 = vsel %vm311, %v582, -inf
    %584 = vmax.xlane.f32.xlu0 %v583
    %v585 = vpop.xlane.xlu0 %584
    %v586 = vsub.f32 %v582, %v585
    %v587 = vmul.f32 %v586, 1.442695
    %v588 = vpow.pop %v587
    %v589 = vsel %vm311, %v588, 0.0
    %590 = vadd.xlane.f32.xlu0 %v589
    %v591 = vpop.xlane.xlu0 %590
    %v592 = vlog2.pop %v591
    %v593 = vmul.f32 %v592, 0.6931472
    %v594 = vsub.f32 %v586, %v593
    %v595 = vrcp.pop %v591
    %v596 = vmul.f32 %v588, %v595
    %v597 = vmul.f32 %v596, %v594
    %v598 = vsel %vm61, %v597, 0.0
    %v599 = vsel %vm311, %v598, 0.0
    %600 = vadd.xlane.f32.xlu0 %v599
    %v601 = vpop.xlane.xlu0 %600
    %v602 = vsub.f32 %v331, %v601
    %v604 = vrot.slane %v58, 1
    %v606 = vadd.f32 %v582, %v604
    %v607 = vsel %vm311, %v606, -inf
    %608 = vmax.xlane.f32.xlu0 %v607
    %v609 = vpop.xlane.xlu0 %608
    %vm610 = vcmp.ge.f32.partialorder %v606, %v609
    %v611 = vsel %vm610, %v60, 128
    %v612 = vsel %vm311, %v611, 2147483647
    %v613 = vand.u32 %v612, 65535
    %v614 = vshra.s32 %v612, 16
    %v615 = vcvt.s32.f32 %v613
    %v616 = vcvt.s32.f32 %v614
    %617 = vmin.xlane.f32.xlu0 %v616
    %v618 = vpop.xlane.xlu0 %617
    %vm619 = vcmp.eq.f32.partialorder %v616, %v618
    %v620 = vsel %vm619, %v615, inf
    %621 = vmin.xlane.f32.xlu0 %v620
    %v622 = vpop.xlane.xlu0 %621
    %v623 = vcvt.f32.s32 %v622
    %v624 = vcvt.f32.s32 %v618
    %v625 = vshll.u32 %v624, 16
    %v626 = vadd.s32 %v625, %v623
    %vm627 = vcmp.eq.s32.totalorder %v60, %v626
    %v628 = vsel %vm627, 1, 0
    %v629 = vcvt.s32.f32 %v628
    %v630 = vmul.f32 %v629, %v594
    %v631 = vsel %vm311, %v630, 0.0
    %632 = vadd.xlane.f32.xlu0 %v631
    %v633 = vpop.xlane.xlu0 %632
    %v634 = vadd.f32 %v360, %v633
    %v635 = vcvt.s32.f32 %v626
    %vm636 = vcmp.eq.s32.totalorder %v60, 3
    %v637 = vsel %vm636, 1, 0
    %v638 = vcvt.s32.f32 %v637
    %v639 = vmul.f32 %v635, %v638
    %v640 = vadd.f32 %v366, %v639
    %v641 = vlaneseq
    %v642 = vshrl.u32 %v641, 7
    %v643 = vsub.s32 0, %v642
    %v644 = vrot.slane %v626, %v643
    %vm645 = vcmp.eq.s32.totalorder %v63, %v644
    %v646 = vsel %vm645, 1, 0
    %vm647 = vcmp.eq.s32.totalorder %v646, 1
    %v648 = vsel %vm647, %v57, 0.0
    %v649 = vsel %vm375, %v648, 0.0
    %v650 = vrot.slane %v649, 4
    %v651 = vadd.f32 %v649, %v650
    %v652 = vrot.slane %v651, 2
    %v653 = vadd.f32 %v651, %v652
    %v654 = vrot.slane %v653, 1
    %v655 = vadd.f32 %v653, %v654
    %v656 = vpack.c.bf16 %v454, %v454
    %658 = vrot.lane.b32.xlu0 %v656, 32
    %v659 = vpop.permute.xlu0 %658
    %v661 = vsel %vm76, %v659, 0
    %663 = vmatprep.subr.bf16.mxu0 0
    %664 = vmatpush1.bf16.msra.mxu0 %v72
    %665 = vmatprep.subr.bf16.mxu0 0
    %666 = vmatpush1.bf16.msra.mxu0 %v73
    %667 = vmatprep.subr.bf16.mxu0 0
    %668 = vmatpush1.bf16.msra.mxu0 0
    %669 = vmatprep.subr.bf16.mxu0 0
    %670 = vmatpush1.bf16.msra.mxu0 0
    %671 = vmatprep.subr.bf16.mxu0 0
    %672 = vmatpush1.bf16.msra.mxu0 0
    %673 = vmatprep.subr.bf16.mxu0 0
    %674 = vmatpush1.bf16.msra.mxu0 0
    %675 = vmatprep.subr.bf16.mxu0 0
    %676 = vmatpush1.bf16.msra.mxu0 0
    %677 = vmatprep.subr.bf16.mxu0 0
    %678 = vmatpush1.bf16.msra.mxu0 0
    %679 = vmatprep.subr.bf16.mxu0 0
    %680 = vmatpush1.bf16.msra.mxu0 0
    %681 = vmatprep.subr.bf16.mxu0 0
    %682 = vmatpush1.bf16.msra.mxu0 0
    %683 = vmatprep.subr.bf16.mxu0 0
    %684 = vmatpush1.bf16.msra.mxu0 0
    %685 = vmatprep.subr.bf16.mxu0 0
    %686 = vmatpush1.bf16.msra.mxu0 0
    %687 = vmatprep.subr.bf16.mxu0 0
    %688 = vmatpush1.bf16.msra.mxu0 0
    %689 = vmatprep.subr.bf16.mxu0 0
    %690 = vmatpush1.bf16.msra.mxu0 0
    %691 = vmatprep.subr.bf16.mxu0 0
    %692 = vmatpush1.bf16.msra.mxu0 0
    %693 = vmatprep.subr.bf16.mxu0 0
    %694 = vmatpush1.bf16.msra.mxu0 0
    %695 = vmatprep.mubr.bf16.mxu0 0
    %696 = vmatmul.mubr.bf16.gmra.mrb[0].mxu0 %v661
    %v697 = vpop.f32.mrb[0].mxu0
    %v698 = vadd.f32 0.0, %v697
    %v699 = vpop.f32.mrb[0].mxu0
    %v700 = vpop.f32.mrb[0].mxu0
    %v701 = vpop.f32.mrb[0].mxu0
    %702 = vdwg.mxu0
    %v703 = vadd.f32 %v655, %v698
    %v704 = vxor.u32 %v703, 2147483648
    %v705 = vmul.f32 %v704, 1.442695
    %v706 = vpow.pop %v705
    %v707 = vadd.f32 %v706, 1.0
    %v708 = vrcp.pop %v707
    %v709 = vmul.f32 1.0, %v708
    %v710 = vtanh.pop %v703
    %v711 = vmul.f32 %v709, %v448
    %713 = vrot.lane.b32.xlu0 %v710, 64
    %v714 = vpop.permute.xlu0 %713
    %v716 = vmul.f32 %v709, %v714
    %718 = vrot.lane.b32.xlu0 %v716, 32
    %v719 = vpop.permute.xlu0 %718
    %v721 = vadd.f32 %v711, %v719
    %v722 = vtanh.pop %v721
    %724 = vrot.lane.b32.xlu0 %v722, 64
    %v725 = vpop.permute.xlu0 %724
    %v727 = vmul.f32 %v709, %v725
    %729 = vrot.lane.b32.xlu0 %v727, 32
    %v730 = vpop.permute.xlu0 %729
    %733 = vrot.lane.b32.xlu0 %v531, 64
    %v734 = vpop.permute.xlu0 %733
    %v736 = vsel %vm76, %v730, %v734
    %v737 = vpack.c.bf16 %v736, %v736
    %v739 = vsel %vm178, %v737, 0
    %741 = vmatprep.subr.bf16.mxu0 0
    %742 = vmatpush1.bf16.msra.mxu0 %v167
    %743 = vmatprep.subr.bf16.mxu0 0
    %744 = vmatpush1.bf16.msra.mxu0 %v168
    %745 = vmatprep.subr.bf16.mxu0 0
    %746 = vmatpush1.bf16.msra.mxu0 %v169
    %747 = vmatprep.subr.bf16.mxu0 0
    %748 = vmatpush1.bf16.msra.mxu0 %v170
    %749 = vmatprep.subr.bf16.mxu0 0
    %750 = vmatpush1.bf16.msra.mxu0 0
    %751 = vmatprep.subr.bf16.mxu0 0
    %752 = vmatpush1.bf16.msra.mxu0 0
    %753 = vmatprep.subr.bf16.mxu0 0
    %754 = vmatpush1.bf16.msra.mxu0 0
    %755 = vmatprep.subr.bf16.mxu0 0
    %756 = vmatpush1.bf16.msra.mxu0 0
    %757 = vmatprep.subr.bf16.mxu0 0
    %758 = vmatpush1.bf16.msra.mxu0 0
    %759 = vmatprep.subr.bf16.mxu0 0
    %760 = vmatpush1.bf16.msra.mxu0 0
    %761 = vmatprep.subr.bf16.mxu0 0
    %762 = vmatpush1.bf16.msra.mxu0 0
    %763 = vmatprep.subr.bf16.mxu0 0
    %764 = vmatpush1.bf16.msra.mxu0 0
    %765 = vmatprep.subr.bf16.mxu0 0
    %766 = vmatpush1.bf16.msra.mxu0 0
    %767 = vmatprep.subr.bf16.mxu0 0
    %768 = vmatpush1.bf16.msra.mxu0 0
    %769 = vmatprep.subr.bf16.mxu0 0
    %770 = vmatpush1.bf16.msra.mxu0 0
    %771 = vmatprep.subr.bf16.mxu0 0
    %772 = vmatpush1.bf16.msra.mxu0 0
    %773 = vmatprep.mubr.bf16.mxu0 0
    %774 = vmatmul.mubr.bf16.gmra.mrb[0].mxu0 %v739
    %v775 = vpop.f32.mrb[0].mxu0
    %v776 = vadd.f32 %v176, %v775
    %v777 = vpop.f32.mrb[0].mxu0
    %v778 = vpop.f32.mrb[0].mxu0
    %v779 = vpop.f32.mrb[0].mxu0
    %780 = vdwg.mxu0
    %v781 = vxor.u32 %v776, 2147483648
    %v782 = vmul.f32 %v781, 1.442695
    %v783 = vpow.pop %v782
    %v784 = vadd.f32 %v783, 1.0
    %v785 = vrcp.pop %v784
    %v786 = vmul.f32 1.0, %v785
    %v787 = vtanh.pop %v776
    %v788 = vmul.f32 %v786, %v525
    %790 = vrot.lane.b32.xlu0 %v787, 64
    %v791 = vpop.permute.xlu0 %790
    %v793 = vmul.f32 %v786, %v791
    %795 = vrot.lane.b32.xlu0 %v793, 32
    %v796 = vpop.permute.xlu0 %795
    %v798 = vadd.f32 %v788, %v796
    %v799 = vtanh.pop %v798
    %801 = vrot.lane.b32.xlu0 %v799, 64
    %v802 = vpop.permute.xlu0 %801
    %v804 = vmul.f32 %v786, %v802
    %v805 = vpack.c.bf16 %v804, %v804
    %807 = vrot.lane.b32.xlu0 %v805, 32
    %v808 = vpop.permute.xlu0 %807
    %v810 = vsel %vm76, %v808, 0
    %812 = vmatprep.subr.bf16.mxu0 0
    %813 = vmatpush1.bf16.msra.mxu0 %v258
    %814 = vmatprep.subr.bf16.mxu0 0
    %815 = vmatpush1.bf16.msra.mxu0 %v259
    %816 = vmatprep.subr.bf16.mxu0 0
    %817 = vmatpush1.bf16.msra.mxu0 0
    %818 = vmatprep.subr.bf16.mxu0 0
    %819 = vmatpush1.bf16.msra.mxu0 0
    %820 = vmatprep.subr.bf16.mxu0 0
    %821 = vmatpush1.bf16.msra.mxu0 0
    %822 = vmatprep.subr.bf16.mxu0 0
    %823 = vmatpush1.bf16.msra.mxu0 0
    %824 = vmatprep.subr.bf16.mxu0 0
    %825 = vmatpush1.bf16.msra.mxu0 0
    %826 = vmatprep.subr.bf16.mxu0 0
    %827 = vmatpush1.bf16.msra.mxu0 0
    %828 = vmatprep.subr.bf16.mxu0 0
    %829 = vmatpush1.bf16.msra.mxu0 0
    %830 = vmatprep.subr.bf16.mxu0 0
    %831 = vmatpush1.bf16.msra.mxu0 0
    %832 = vmatprep.subr.bf16.mxu0 0
    %833 = vmatpush1.bf16.msra.mxu0 0
    %834 = vmatprep.subr.bf16.mxu0 0
    %835 = vmatpush1.bf16.msra.mxu0 0
    %836 = vmatprep.subr.bf16.mxu0 0
    %837 = vmatpush1.bf16.msra.mxu0 0
    %838 = vmatprep.subr.bf16.mxu0 0
    %839 = vmatpush1.bf16.msra.mxu0 0
    %840 = vmatprep.subr.bf16.mxu0 0
    %841 = vmatpush1.bf16.msra.mxu0 0
    %842 = vmatprep.subr.bf16.mxu0 0
    %843 = vmatpush1.bf16.msra.mxu0 0
    %844 = vmatprep.mubr.bf16.mxu0 0
    %845 = vmatmul.mubr.bf16.gmra.mrb[0].mxu0 %v810
    %v846 = vpop.f32.mrb[0].mxu0
    %v847 = vadd.f32 %v262, %v846
    %v848 = vpop.f32.mrb[0].mxu0
    %v849 = vpop.f32.mrb[0].mxu0
    %v850 = vpop.f32.mrb[0].mxu0
    %851 = vdwg.mxu0
    %v852 = vmul.f32 %v847, 0.2
    %v853 = vtanh.pop %v852
    %v854 = vmul.f32 %v853, 2.5
    %v855 = vsel %vm61, %v854, -1e+30
    %v856 = vsel %vm311, %v855, -inf
    %857 = vmax.xlane.f32.xlu0 %v856
    %v858 = vpop.xlane.xlu0 %857
    %v859 = vsub.f32 %v855, %v858
    %v860 = vmul.f32 %v859, 1.442695
    %v861 = vpow.pop %v860
    %v862 = vsel %vm311, %v861, 0.0
    %863 = vadd.xlane.f32.xlu0 %v862
    %v864 = vpop.xlane.xlu0 %863
    %v865 = vlog2.pop %v864
    %v866 = vmul.f32 %v865, 0.6931472
    %v867 = vsub.f32 %v859, %v866
    %v868 = vrcp.pop %v864
    %v869 = vmul.f32 %v861, %v868
    %v870 = vmul.f32 %v869, %v867
    %v871 = vsel %vm61, %v870, 0.0
    %v872 = vsel %vm311, %v871, 0.0
    %873 = vadd.xlane.f32.xlu0 %v872
    %v874 = vpop.xlane.xlu0 %873
    %v875 = vsub.f32 %v602, %v874
    %v876 = vrot.slane %v58, 2
    %v878 = vadd.f32 %v855, %v876
    %v879 = vsel %vm311, %v878, -inf
    %880 = vmax.xlane.f32.xlu0 %v879
    %v881 = vpop.xlane.xlu0 %880
    %vm882 = vcmp.ge.f32.partialorder %v878, %v881
    %v883 = vsel %vm882, %v60, 128
    %v884 = vsel %vm311, %v883, 2147483647
    %v885 = vand.u32 %v884, 65535
    %v886 = vshra.s32 %v884, 16
    %v887 = vcvt.s32.f32 %v885
    %v888 = vcvt.s32.f32 %v886
    %889 = vmin.xlane.f32.xlu0 %v888
    %v890 = vpop.xlane.xlu0 %889
    %vm891 = vcmp.eq.f32.partialorder %v888, %v890
    %v892 = vsel %vm891, %v887, inf
    %893 = vmin.xlane.f32.xlu0 %v892
    %v894 = vpop.xlane.xlu0 %893
    %v895 = vcvt.f32.s32 %v894
    %v896 = vcvt.f32.s32 %v890
    %v897 = vshll.u32 %v896, 16
    %v898 = vadd.s32 %v897, %v895
    %vm899 = vcmp.eq.s32.totalorder %v60, %v898
    %v900 = vsel %vm899, 1, 0
    %v901 = vcvt.s32.f32 %v900
    %v902 = vmul.f32 %v901, %v867
    %v903 = vsel %vm311, %v902, 0.0
    %904 = vadd.xlane.f32.xlu0 %v903
    %v905 = vpop.xlane.xlu0 %904
    %v906 = vadd.f32 %v634, %v905
    %v907 = vcvt.s32.f32 %v898
    %vm908 = vcmp.eq.s32.totalorder %v60, 4
    %v909 = vsel %vm908, 1, 0
    %v910 = vcvt.s32.f32 %v909
    %v911 = vmul.f32 %v907, %v910
    %v912 = vadd.f32 %v640, %v911
    %v913 = vlaneseq
    %v914 = vshrl.u32 %v913, 7
    %v915 = vsub.s32 0, %v914
    %v916 = vrot.slane %v898, %v915
    %vm917 = vcmp.eq.s32.totalorder %v63, %v916
    %v918 = vsel %vm917, 1, 0
    %vm919 = vcmp.eq.s32.totalorder %v918, 1
    %v920 = vsel %vm919, %v57, 0.0
    %v921 = vsel %vm375, %v920, 0.0
    %v922 = vrot.slane %v921, 4
    %v923 = vadd.f32 %v921, %v922
    %v924 = vrot.slane %v923, 2
    %v925 = vadd.f32 %v923, %v924
    %v926 = vrot.slane %v925, 1
    %v927 = vadd.f32 %v925, %v926
    %v928 = vpack.c.bf16 %v727, %v727
    %930 = vrot.lane.b32.xlu0 %v928, 32
    %v931 = vpop.permute.xlu0 %930
    %v933 = vsel %vm76, %v931, 0
    %935 = vmatprep.subr.bf16.mxu0 0
    %936 = vmatpush1.bf16.msra.mxu0 %v72
    %937 = vmatprep.subr.bf16.mxu0 0
    %938 = vmatpush1.bf16.msra.mxu0 %v73
    %939 = vmatprep.subr.bf16.mxu0 0
    %940 = vmatpush1.bf16.msra.mxu0 0
    %941 = vmatprep.subr.bf16.mxu0 0
    %942 = vmatpush1.bf16.msra.mxu0 0
    %943 = vmatprep.subr.bf16.mxu0 0
    %944 = vmatpush1.bf16.msra.mxu0 0
    %945 = vmatprep.subr.bf16.mxu0 0
    %946 = vmatpush1.bf16.msra.mxu0 0
    %947 = vmatprep.subr.bf16.mxu0 0
    %948 = vmatpush1.bf16.msra.mxu0 0
    %949 = vmatprep.subr.bf16.mxu0 0
    %950 = vmatpush1.bf16.msra.mxu0 0
    %951 = vmatprep.subr.bf16.mxu0 0
    %952 = vmatpush1.bf16.msra.mxu0 0
    %953 = vmatprep.subr.bf16.mxu0 0
    %954 = vmatpush1.bf16.msra.mxu0 0
    %955 = vmatprep.subr.bf16.mxu0 0
    %956 = vmatpush1.bf16.msra.mxu0 0
    %957 = vmatprep.subr.bf16.mxu0 0
    %958 = vmatpush1.bf16.msra.mxu0 0
    %959 = vmatprep.subr.bf16.mxu0 0
    %960 = vmatpush1.bf16.msra.mxu0 0
    %961 = vmatprep.subr.bf16.mxu0 0
    %962 = vmatpush1.bf16.msra.mxu0 0
    %963 = vmatprep.subr.bf16.mxu0 0
    %964 = vmatpush1.bf16.msra.mxu0 0
    %965 = vmatprep.subr.bf16.mxu0 0
    %966 = vmatpush1.bf16.msra.mxu0 0
    %967 = vmatprep.mubr.bf16.mxu0 0
    %968 = vmatmul.mubr.bf16.gmra.mrb[0].mxu0 %v933
    %v969 = vpop.f32.mrb[0].mxu0
    %v970 = vadd.f32 0.0, %v969
    %v971 = vpop.f32.mrb[0].mxu0
    %v972 = vpop.f32.mrb[0].mxu0
    %v973 = vpop.f32.mrb[0].mxu0
    %974 = vdwg.mxu0
    %v975 = vadd.f32 %v927, %v970
    %v976 = vxor.u32 %v975, 2147483648
    %v977 = vmul.f32 %v976, 1.442695
    %v978 = vpow.pop %v977
    %v979 = vadd.f32 %v978, 1.0
    %v980 = vrcp.pop %v979
    %v981 = vmul.f32 1.0, %v980
    %v982 = vtanh.pop %v975
    %v983 = vmul.f32 %v981, %v721
    %985 = vrot.lane.b32.xlu0 %v982, 64
    %v986 = vpop.permute.xlu0 %985
    %v988 = vmul.f32 %v981, %v986
    %990 = vrot.lane.b32.xlu0 %v988, 32
    %v991 = vpop.permute.xlu0 %990
    %v993 = vadd.f32 %v983, %v991
    %v994 = vtanh.pop %v993
    %996 = vrot.lane.b32.xlu0 %v994, 64
    %v997 = vpop.permute.xlu0 %996
    %v999 = vmul.f32 %v981, %v997
    %1001 = vrot.lane.b32.xlu0 %v999, 32
    %v1002 = vpop.permute.xlu0 %1001
    %1005 = vrot.lane.b32.xlu0 %v804, 64
    %v1006 = vpop.permute.xlu0 %1005
    %v1008 = vsel %vm76, %v1002, %v1006
    %v1009 = vpack.c.bf16 %v1008, %v1008
    %v1011 = vsel %vm178, %v1009, 0
    %1013 = vmatprep.subr.bf16.mxu0 0
    %1014 = vmatpush1.bf16.msra.mxu0 %v167
    %1015 = vmatprep.subr.bf16.mxu0 0
    %1016 = vmatpush1.bf16.msra.mxu0 %v168
    %1017 = vmatprep.subr.bf16.mxu0 0
    %1018 = vmatpush1.bf16.msra.mxu0 %v169
    %1019 = vmatprep.subr.bf16.mxu0 0
    %1020 = vmatpush1.bf16.msra.mxu0 %v170
    %1021 = vmatprep.subr.bf16.mxu0 0
    %1022 = vmatpush1.bf16.msra.mxu0 0
    %1023 = vmatprep.subr.bf16.mxu0 0
    %1024 = vmatpush1.bf16.msra.mxu0 0
    %1025 = vmatprep.subr.bf16.mxu0 0
    %1026 = vmatpush1.bf16.msra.mxu0 0
    %1027 = vmatprep.subr.bf16.mxu0 0
    %1028 = vmatpush1.bf16.msra.mxu0 0
    %1029 = vmatprep.subr.bf16.mxu0 0
    %1030 = vmatpush1.bf16.msra.mxu0 0
    %1031 = vmatprep.subr.bf16.mxu0 0
    %1032 = vmatpush1.bf16.msra.mxu0 0
    %1033 = vmatprep.subr.bf16.mxu0 0
    %1034 = vmatpush1.bf16.msra.mxu0 0
    %1035 = vmatprep.subr.bf16.mxu0 0
    %1036 = vmatpush1.bf16.msra.mxu0 0
    %1037 = vmatprep.subr.bf16.mxu0 0
    %1038 = vmatpush1.bf16.msra.mxu0 0
    %1039 = vmatprep.subr.bf16.mxu0 0
    %1040 = vmatpush1.bf16.msra.mxu0 0
    %1041 = vmatprep.subr.bf16.mxu0 0
    %1042 = vmatpush1.bf16.msra.mxu0 0
    %1043 = vmatprep.subr.bf16.mxu0 0
    %1044 = vmatpush1.bf16.msra.mxu0 0
    %1045 = vmatprep.mubr.bf16.mxu0 0
    %1046 = vmatmul.mubr.bf16.gmra.mrb[0].mxu0 %v1011
    %v1047 = vpop.f32.mrb[0].mxu0
    %v1048 = vadd.f32 %v176, %v1047
    %v1049 = vpop.f32.mrb[0].mxu0
    %v1050 = vpop.f32.mrb[0].mxu0
    %v1051 = vpop.f32.mrb[0].mxu0
    %1052 = vdwg.mxu0
    %v1053 = vxor.u32 %v1048, 2147483648
    %v1054 = vmul.f32 %v1053, 1.442695
    %v1055 = vpow.pop %v1054
    %v1056 = vadd.f32 %v1055, 1.0
    %v1057 = vrcp.pop %v1056
    %v1058 = vmul.f32 1.0, %v1057
    %v1059 = vtanh.pop %v1048
    %v1060 = vmul.f32 %v1058, %v798
    %1062 = vrot.lane.b32.xlu0 %v1059, 64
    %v1063 = vpop.permute.xlu0 %1062
    %v1065 = vmul.f32 %v1058, %v1063
    %1067 = vrot.lane.b32.xlu0 %v1065, 32
    %v1068 = vpop.permute.xlu0 %1067
    %v1070 = vadd.f32 %v1060, %v1068
    %v1071 = vtanh.pop %v1070
    %1073 = vrot.lane.b32.xlu0 %v1071, 64
    %v1074 = vpop.permute.xlu0 %1073
    %v1076 = vmul.f32 %v1058, %v1074
    %v1077 = vpack.c.bf16 %v1076, %v1076
    %1079 = vrot.lane.b32.xlu0 %v1077, 32
    %v1080 = vpop.permute.xlu0 %1079
    %v1082 = vsel %vm76, %v1080, 0
    %1084 = vmatprep.subr.bf16.mxu0 0
    %1085 = vmatpush1.bf16.msra.mxu0 %v258
    %1086 = vmatprep.subr.bf16.mxu0 0
    %1087 = vmatpush1.bf16.msra.mxu0 %v259
    %1088 = vmatprep.subr.bf16.mxu0 0
    %1089 = vmatpush1.bf16.msra.mxu0 0
    %1090 = vmatprep.subr.bf16.mxu0 0
    %1091 = vmatpush1.bf16.msra.mxu0 0
    %1092 = vmatprep.subr.bf16.mxu0 0
    %1093 = vmatpush1.bf16.msra.mxu0 0
    %1094 = vmatprep.subr.bf16.mxu0 0
    %1095 = vmatpush1.bf16.msra.mxu0 0
    %1096 = vmatprep.subr.bf16.mxu0 0
    %1097 = vmatpush1.bf16.msra.mxu0 0
    %1098 = vmatprep.subr.bf16.mxu0 0
    %1099 = vmatpush1.bf16.msra.mxu0 0
    %1100 = vmatprep.subr.bf16.mxu0 0
    %1101 = vmatpush1.bf16.msra.mxu0 0
    %1102 = vmatprep.subr.bf16.mxu0 0
    %1103 = vmatpush1.bf16.msra.mxu0 0
    %1104 = vmatprep.subr.bf16.mxu0 0
    %1105 = vmatpush1.bf16.msra.mxu0 0
    %1106 = vmatprep.subr.bf16.mxu0 0
    %1107 = vmatpush1.bf16.msra.mxu0 0
    %1108 = vmatprep.subr.bf16.mxu0 0
    %1109 = vmatpush1.bf16.msra.mxu0 0
    %1110 = vmatprep.subr.bf16.mxu0 0
    %1111 = vmatpush1.bf16.msra.mxu0 0
    %1112 = vmatprep.subr.bf16.mxu0 0
    %1113 = vmatpush1.bf16.msra.mxu0 0
    %1114 = vmatprep.subr.bf16.mxu0 0
    %1115 = vmatpush1.bf16.msra.mxu0 0
    %1116 = vmatprep.mubr.bf16.mxu0 0
    %1117 = vmatmul.mubr.bf16.gmra.mrb[0].mxu0 %v1082
    %v1118 = vpop.f32.mrb[0].mxu0
    %v1119 = vadd.f32 %v262, %v1118
    %v1120 = vpop.f32.mrb[0].mxu0
    %v1121 = vpop.f32.mrb[0].mxu0
    %v1122 = vpop.f32.mrb[0].mxu0
    %1123 = vdwg.mxu0
    %v1124 = vmul.f32 %v1119, 0.2
    %v1125 = vtanh.pop %v1124
    %v1126 = vmul.f32 %v1125, 2.5
    %v1127 = vsel %vm61, %v1126, -1e+30
    %v1128 = vsel %vm311, %v1127, -inf
    %1129 = vmax.xlane.f32.xlu0 %v1128
    %v1130 = vpop.xlane.xlu0 %1129
    %v1131 = vsub.f32 %v1127, %v1130
    %v1132 = vmul.f32 %v1131, 1.442695
    %v1133 = vpow.pop %v1132
    %v1134 = vsel %vm311, %v1133, 0.0
    %1135 = vadd.xlane.f32.xlu0 %v1134
    %v1136 = vpop.xlane.xlu0 %1135
    %v1137 = vlog2.pop %v1136
    %v1138 = vmul.f32 %v1137, 0.6931472
    %v1139 = vsub.f32 %v1131, %v1138
    %v1140 = vrcp.pop %v1136
    %v1141 = vmul.f32 %v1133, %v1140
    %v1142 = vmul.f32 %v1141, %v1139
    %v1143 = vsel %vm61, %v1142, 0.0
    %v1144 = vsel %vm311, %v1143, 0.0
    %1145 = vadd.xlane.f32.xlu0 %v1144
    %v1146 = vpop.xlane.xlu0 %1145
    %v1147 = vsub.f32 %v875, %v1146
    %v1148 = vrot.slane %v58, 3
    %v1150 = vadd.f32 %v1127, %v1148
    %v1151 = vsel %vm311, %v1150, -inf
    %1152 = vmax.xlane.f32.xlu0 %v1151
    %v1153 = vpop.xlane.xlu0 %1152
    %vm1154 = vcmp.ge.f32.partialorder %v1150, %v1153
    %v1155 = vsel %vm1154, %v60, 128
    %v1156 = vsel %vm311, %v1155, 2147483647
    %v1157 = vand.u32 %v1156, 65535
    %v1158 = vshra.s32 %v1156, 16
    %v1159 = vcvt.s32.f32 %v1157
    %v1160 = vcvt.s32.f32 %v1158
    %1161 = vmin.xlane.f32.xlu0 %v1160
    %v1162 = vpop.xlane.xlu0 %1161
    %vm1163 = vcmp.eq.f32.partialorder %v1160, %v1162
    %v1164 = vsel %vm1163, %v1159, inf
    %1165 = vmin.xlane.f32.xlu0 %v1164
    %v1166 = vpop.xlane.xlu0 %1165
    %v1167 = vcvt.f32.s32 %v1166
    %v1168 = vcvt.f32.s32 %v1162
    %v1169 = vshll.u32 %v1168, 16
    %v1170 = vadd.s32 %v1169, %v1167
    %vm1171 = vcmp.eq.s32.totalorder %v60, %v1170
    %v1172 = vsel %vm1171, 1, 0
    %v1173 = vcvt.s32.f32 %v1172
    %v1174 = vmul.f32 %v1173, %v1139
    %v1175 = vsel %vm311, %v1174, 0.0
    %1176 = vadd.xlane.f32.xlu0 %v1175
    %v1177 = vpop.xlane.xlu0 %1176
    %v1178 = vadd.f32 %v906, %v1177
    %v1179 = vcvt.s32.f32 %v1170
    %vm1180 = vcmp.eq.s32.totalorder %v60, 5
    %v1181 = vsel %vm1180, 1, 0
    %v1182 = vcvt.s32.f32 %v1181
    %v1183 = vmul.f32 %v1179, %v1182
    %v1184 = vadd.f32 %v912, %v1183
    %v1185 = vlaneseq
    %v1186 = vshrl.u32 %v1185, 7
    %v1187 = vsub.s32 0, %v1186
    %v1188 = vrot.slane %v1170, %v1187
    %vm1189 = vcmp.eq.s32.totalorder %v63, %v1188
    %v1190 = vsel %vm1189, 1, 0
    %vm1191 = vcmp.eq.s32.totalorder %v1190, 1
    %v1192 = vsel %vm1191, %v57, 0.0
    %v1193 = vsel %vm375, %v1192, 0.0
    %v1194 = vrot.slane %v1193, 4
    %v1195 = vadd.f32 %v1193, %v1194
    %v1196 = vrot.slane %v1195, 2
    %v1197 = vadd.f32 %v1195, %v1196
    %v1198 = vrot.slane %v1197, 1
    %v1199 = vadd.f32 %v1197, %v1198
    %v1200 = vpack.c.bf16 %v999, %v999
    %1202 = vrot.lane.b32.xlu0 %v1200, 32
    %v1203 = vpop.permute.xlu0 %1202
    %v1205 = vsel %vm76, %v1203, 0
    %1207 = vmatprep.subr.bf16.mxu0 0
    %1208 = vmatpush1.bf16.msra.mxu0 %v72
    %1209 = vmatprep.subr.bf16.mxu0 0
    %1210 = vmatpush1.bf16.msra.mxu0 %v73
    %1211 = vmatprep.subr.bf16.mxu0 0
    %1212 = vmatpush1.bf16.msra.mxu0 0
    %1213 = vmatprep.subr.bf16.mxu0 0
    %1214 = vmatpush1.bf16.msra.mxu0 0
    %1215 = vmatprep.subr.bf16.mxu0 0
    %1216 = vmatpush1.bf16.msra.mxu0 0
    %1217 = vmatprep.subr.bf16.mxu0 0
    %1218 = vmatpush1.bf16.msra.mxu0 0
    %1219 = vmatprep.subr.bf16.mxu0 0
    %1220 = vmatpush1.bf16.msra.mxu0 0
    %1221 = vmatprep.subr.bf16.mxu0 0
    %1222 = vmatpush1.bf16.msra.mxu0 0
    %1223 = vmatprep.subr.bf16.mxu0 0
    %1224 = vmatpush1.bf16.msra.mxu0 0
    %1225 = vmatprep.subr.bf16.mxu0 0
    %1226 = vmatpush1.bf16.msra.mxu0 0
    %1227 = vmatprep.subr.bf16.mxu0 0
    %1228 = vmatpush1.bf16.msra.mxu0 0
    %1229 = vmatprep.subr.bf16.mxu0 0
    %1230 = vmatpush1.bf16.msra.mxu0 0
    %1231 = vmatprep.subr.bf16.mxu0 0
    %1232 = vmatpush1.bf16.msra.mxu0 0
    %1233 = vmatprep.subr.bf16.mxu0 0
    %1234 = vmatpush1.bf16.msra.mxu0 0
    %1235 = vmatprep.subr.bf16.mxu0 0
    %1236 = vmatpush1.bf16.msra.mxu0 0
    %1237 = vmatprep.subr.bf16.mxu0 0
    %1238 = vmatpush1.bf16.msra.mxu0 0
    %1239 = vmatprep.mubr.bf16.mxu0 0
    %1240 = vmatmul.mubr.bf16.gmra.mrb[0].mxu0 %v1205
    %v1241 = vpop.f32.mrb[0].mxu0
    %v1242 = vadd.f32 0.0, %v1241
    %v1243 = vpop.f32.mrb[0].mxu0
    %v1244 = vpop.f32.mrb[0].mxu0
    %v1245 = vpop.f32.mrb[0].mxu0
    %1246 = vdwg.mxu0
    %v1247 = vadd.f32 %v1199, %v1242
    %v1248 = vxor.u32 %v1247, 2147483648
    %v1249 = vmul.f32 %v1248, 1.442695
    %v1250 = vpow.pop %v1249
    %v1251 = vadd.f32 %v1250, 1.0
    %v1252 = vrcp.pop %v1251
    %v1253 = vmul.f32 1.0, %v1252
    %v1254 = vtanh.pop %v1247
    %v1255 = vmul.f32 %v1253, %v993
    %1257 = vrot.lane.b32.xlu0 %v1254, 64
    %v1258 = vpop.permute.xlu0 %1257
    %v1260 = vmul.f32 %v1253, %v1258
    %1262 = vrot.lane.b32.xlu0 %v1260, 32
    %v1263 = vpop.permute.xlu0 %1262
    %v1265 = vadd.f32 %v1255, %v1263
    %v1266 = vtanh.pop %v1265
    %1268 = vrot.lane.b32.xlu0 %v1266, 64
    %v1269 = vpop.permute.xlu0 %1268
    %v1271 = vmul.f32 %v1253, %v1269
    %1273 = vrot.lane.b32.xlu0 %v1271, 32
    %v1274 = vpop.permute.xlu0 %1273
    %1277 = vrot.lane.b32.xlu0 %v1076, 64
    %v1278 = vpop.permute.xlu0 %1277
    %v1280 = vsel %vm76, %v1274, %v1278
    %v1281 = vpack.c.bf16 %v1280, %v1280
    %v1283 = vsel %vm178, %v1281, 0
    %1285 = vmatprep.subr.bf16.mxu0 0
    %1286 = vmatpush1.bf16.msra.mxu0 %v167
    %1287 = vmatprep.subr.bf16.mxu0 0
    %1288 = vmatpush1.bf16.msra.mxu0 %v168
    %1289 = vmatprep.subr.bf16.mxu0 0
    %1290 = vmatpush1.bf16.msra.mxu0 %v169
    %1291 = vmatprep.subr.bf16.mxu0 0
    %1292 = vmatpush1.bf16.msra.mxu0 %v170
    %1293 = vmatprep.subr.bf16.mxu0 0
    %1294 = vmatpush1.bf16.msra.mxu0 0
    %1295 = vmatprep.subr.bf16.mxu0 0
    %1296 = vmatpush1.bf16.msra.mxu0 0
    %1297 = vmatprep.subr.bf16.mxu0 0
    %1298 = vmatpush1.bf16.msra.mxu0 0
    %1299 = vmatprep.subr.bf16.mxu0 0
    %1300 = vmatpush1.bf16.msra.mxu0 0
    %1301 = vmatprep.subr.bf16.mxu0 0
    %1302 = vmatpush1.bf16.msra.mxu0 0
    %1303 = vmatprep.subr.bf16.mxu0 0
    %1304 = vmatpush1.bf16.msra.mxu0 0
    %1305 = vmatprep.subr.bf16.mxu0 0
    %1306 = vmatpush1.bf16.msra.mxu0 0
    %1307 = vmatprep.subr.bf16.mxu0 0
    %1308 = vmatpush1.bf16.msra.mxu0 0
    %1309 = vmatprep.subr.bf16.mxu0 0
    %1310 = vmatpush1.bf16.msra.mxu0 0
    %1311 = vmatprep.subr.bf16.mxu0 0
    %1312 = vmatpush1.bf16.msra.mxu0 0
    %1313 = vmatprep.subr.bf16.mxu0 0
    %1314 = vmatpush1.bf16.msra.mxu0 0
    %1315 = vmatprep.subr.bf16.mxu0 0
    %1316 = vmatpush1.bf16.msra.mxu0 0
    %1317 = vmatprep.mubr.bf16.mxu0 0
    %1318 = vmatmul.mubr.bf16.gmra.mrb[0].mxu0 %v1283
    %v1319 = vpop.f32.mrb[0].mxu0
    %v1320 = vadd.f32 %v176, %v1319
    %v1321 = vpop.f32.mrb[0].mxu0
    %v1322 = vpop.f32.mrb[0].mxu0
    %v1323 = vpop.f32.mrb[0].mxu0
    %1324 = vdwg.mxu0
    %v1325 = vxor.u32 %v1320, 2147483648
    %v1326 = vmul.f32 %v1325, 1.442695
    %v1327 = vpow.pop %v1326
    %v1328 = vadd.f32 %v1327, 1.0
    %v1329 = vrcp.pop %v1328
    %v1330 = vmul.f32 1.0, %v1329
    %v1331 = vtanh.pop %v1320
    %v1332 = vmul.f32 %v1330, %v1070
    %1334 = vrot.lane.b32.xlu0 %v1331, 64
    %v1335 = vpop.permute.xlu0 %1334
    %v1337 = vmul.f32 %v1330, %v1335
    %1339 = vrot.lane.b32.xlu0 %v1337, 32
    %v1340 = vpop.permute.xlu0 %1339
    %v1342 = vadd.f32 %v1332, %v1340
    %v1343 = vtanh.pop %v1342
    %1345 = vrot.lane.b32.xlu0 %v1343, 64
    %v1346 = vpop.permute.xlu0 %1345
    %v1348 = vmul.f32 %v1330, %v1346
    %v1349 = vpack.c.bf16 %v1348, %v1348
    %1351 = vrot.lane.b32.xlu0 %v1349, 32
    %v1352 = vpop.permute.xlu0 %1351
    %v1354 = vsel %vm76, %v1352, 0
    %1356 = vmatprep.subr.bf16.mxu0 0
    %1357 = vmatpush1.bf16.msra.mxu0 %v258
    %1358 = vmatprep.subr.bf16.mxu0 0
    %1359 = vmatpush1.bf16.msra.mxu0 %v259
    %1360 = vmatprep.subr.bf16.mxu0 0
    %1361 = vmatpush1.bf16.msra.mxu0 0
    %1362 = vmatprep.subr.bf16.mxu0 0
    %1363 = vmatpush1.bf16.msra.mxu0 0
    %1364 = vmatprep.subr.bf16.mxu0 0
    %1365 = vmatpush1.bf16.msra.mxu0 0
    %1366 = vmatprep.subr.bf16.mxu0 0
    %1367 = vmatpush1.bf16.msra.mxu0 0
    %1368 = vmatprep.subr.bf16.mxu0 0
    %1369 = vmatpush1.bf16.msra.mxu0 0
    %1370 = vmatprep.subr.bf16.mxu0 0
    %1371 = vmatpush1.bf16.msra.mxu0 0
    %1372 = vmatprep.subr.bf16.mxu0 0
    %1373 = vmatpush1.bf16.msra.mxu0 0
    %1374 = vmatprep.subr.bf16.mxu0 0
    %1375 = vmatpush1.bf16.msra.mxu0 0
    %1376 = vmatprep.subr.bf16.mxu0 0
    %1377 = vmatpush1.bf16.msra.mxu0 0
    %1378 = vmatprep.subr.bf16.mxu0 0
    %1379 = vmatpush1.bf16.msra.mxu0 0
    %1380 = vmatprep.subr.bf16.mxu0 0
    %1381 = vmatpush1.bf16.msra.mxu0 0
    %1382 = vmatprep.subr.bf16.mxu0 0
    %1383 = vmatpush1.bf16.msra.mxu0 0
    %1384 = vmatprep.subr.bf16.mxu0 0
    %1385 = vmatpush1.bf16.msra.mxu0 0
    %1386 = vmatprep.subr.bf16.mxu0 0
    %1387 = vmatpush1.bf16.msra.mxu0 0
    %1388 = vmatprep.mubr.bf16.mxu0 0
    %1389 = vmatmul.mubr.bf16.gmra.mrb[0].mxu0 %v1354
    %v1390 = vpop.f32.mrb[0].mxu0
    %v1391 = vadd.f32 %v262, %v1390
    %v1392 = vpop.f32.mrb[0].mxu0
    %v1393 = vpop.f32.mrb[0].mxu0
    %v1394 = vpop.f32.mrb[0].mxu0
    %1395 = vdwg.mxu0
    %v1396 = vmul.f32 %v1391, 0.2
    %v1397 = vtanh.pop %v1396
    %v1398 = vmul.f32 %v1397, 2.5
    %v1399 = vsel %vm61, %v1398, -1e+30
    %v1400 = vsel %vm311, %v1399, -inf
    %1401 = vmax.xlane.f32.xlu0 %v1400
    %v1402 = vpop.xlane.xlu0 %1401
    %v1403 = vsub.f32 %v1399, %v1402
    %v1404 = vmul.f32 %v1403, 1.442695
    %v1405 = vpow.pop %v1404
    %v1406 = vsel %vm311, %v1405, 0.0
    %1407 = vadd.xlane.f32.xlu0 %v1406
    %v1408 = vpop.xlane.xlu0 %1407
    %v1409 = vlog2.pop %v1408
    %v1410 = vmul.f32 %v1409, 0.6931472
    %v1411 = vsub.f32 %v1403, %v1410
    %v1412 = vrcp.pop %v1408
    %v1413 = vmul.f32 %v1405, %v1412
    %v1414 = vmul.f32 %v1413, %v1411
    %v1415 = vsel %vm61, %v1414, 0.0
    %v1416 = vsel %vm311, %v1415, 0.0
    %1417 = vadd.xlane.f32.xlu0 %v1416
    %v1418 = vpop.xlane.xlu0 %1417
    %v1419 = vsub.f32 %v1147, %v1418
    %v1420 = vrot.slane %v58, 4
    %v1422 = vadd.f32 %v1399, %v1420
    %v1423 = vsel %vm311, %v1422, -inf
    %1424 = vmax.xlane.f32.xlu0 %v1423
    %v1425 = vpop.xlane.xlu0 %1424
    %vm1426 = vcmp.ge.f32.partialorder %v1422, %v1425
    %v1427 = vsel %vm1426, %v60, 128
    %v1428 = vsel %vm311, %v1427, 2147483647
    %v1429 = vand.u32 %v1428, 65535
    %v1430 = vshra.s32 %v1428, 16
    %v1431 = vcvt.s32.f32 %v1429
    %v1432 = vcvt.s32.f32 %v1430
    %1433 = vmin.xlane.f32.xlu0 %v1432
    %v1434 = vpop.xlane.xlu0 %1433
    %vm1435 = vcmp.eq.f32.partialorder %v1432, %v1434
    %v1436 = vsel %vm1435, %v1431, inf
    %1437 = vmin.xlane.f32.xlu0 %v1436
    %v1438 = vpop.xlane.xlu0 %1437
    %v1439 = vcvt.f32.s32 %v1438
    %v1440 = vcvt.f32.s32 %v1434
    %v1441 = vshll.u32 %v1440, 16
    %v1442 = vadd.s32 %v1441, %v1439
    %vm1443 = vcmp.eq.s32.totalorder %v60, %v1442
    %v1444 = vsel %vm1443, 1, 0
    %v1445 = vcvt.s32.f32 %v1444
    %v1446 = vmul.f32 %v1445, %v1411
    %v1447 = vsel %vm311, %v1446, 0.0
    %1448 = vadd.xlane.f32.xlu0 %v1447
    %v1449 = vpop.xlane.xlu0 %1448
    %v1450 = vadd.f32 %v1178, %v1449
    %v1451 = vcvt.s32.f32 %v1442
    %vm1452 = vcmp.eq.s32.totalorder %v60, 6
    %v1453 = vsel %vm1452, 1, 0
    %v1454 = vcvt.s32.f32 %v1453
    %v1455 = vmul.f32 %v1451, %v1454
    %v1456 = vadd.f32 %v1184, %v1455
    %v1457 = vlaneseq
    %v1458 = vshrl.u32 %v1457, 7
    %v1459 = vsub.s32 0, %v1458
    %v1460 = vrot.slane %v1442, %v1459
    %vm1461 = vcmp.eq.s32.totalorder %v63, %v1460
    %v1462 = vsel %vm1461, 1, 0
    %vm1463 = vcmp.eq.s32.totalorder %v1462, 1
    %v1464 = vsel %vm1463, %v57, 0.0
    %v1465 = vsel %vm375, %v1464, 0.0
    %v1466 = vrot.slane %v1465, 4
    %v1467 = vadd.f32 %v1465, %v1466
    %v1468 = vrot.slane %v1467, 2
    %v1469 = vadd.f32 %v1467, %v1468
    %v1470 = vrot.slane %v1469, 1
    %v1471 = vadd.f32 %v1469, %v1470
    %v1472 = vpack.c.bf16 %v1271, %v1271
    %1474 = vrot.lane.b32.xlu0 %v1472, 32
    %v1475 = vpop.permute.xlu0 %1474
    %v1477 = vsel %vm76, %v1475, 0
    %1479 = vmatprep.subr.bf16.mxu0 0
    %1480 = vmatpush1.bf16.msra.mxu0 %v72
    %1481 = vmatprep.subr.bf16.mxu0 0
    %1482 = vmatpush1.bf16.msra.mxu0 %v73
    %1483 = vmatprep.subr.bf16.mxu0 0
    %1484 = vmatpush1.bf16.msra.mxu0 0
    %1485 = vmatprep.subr.bf16.mxu0 0
    %1486 = vmatpush1.bf16.msra.mxu0 0
    %1487 = vmatprep.subr.bf16.mxu0 0
    %1488 = vmatpush1.bf16.msra.mxu0 0
    %1489 = vmatprep.subr.bf16.mxu0 0
    %1490 = vmatpush1.bf16.msra.mxu0 0
    %1491 = vmatprep.subr.bf16.mxu0 0
    %1492 = vmatpush1.bf16.msra.mxu0 0
    %1493 = vmatprep.subr.bf16.mxu0 0
    %1494 = vmatpush1.bf16.msra.mxu0 0
    %1495 = vmatprep.subr.bf16.mxu0 0
    %1496 = vmatpush1.bf16.msra.mxu0 0
    %1497 = vmatprep.subr.bf16.mxu0 0
    %1498 = vmatpush1.bf16.msra.mxu0 0
    %1499 = vmatprep.subr.bf16.mxu0 0
    %1500 = vmatpush1.bf16.msra.mxu0 0
    %1501 = vmatprep.subr.bf16.mxu0 0
    %1502 = vmatpush1.bf16.msra.mxu0 0
    %1503 = vmatprep.subr.bf16.mxu0 0
    %1504 = vmatpush1.bf16.msra.mxu0 0
    %1505 = vmatprep.subr.bf16.mxu0 0
    %1506 = vmatpush1.bf16.msra.mxu0 0
    %1507 = vmatprep.subr.bf16.mxu0 0
    %1508 = vmatpush1.bf16.msra.mxu0 0
    %1509 = vmatprep.subr.bf16.mxu0 0
    %1510 = vmatpush1.bf16.msra.mxu0 0
    %1511 = vmatprep.mubr.bf16.mxu0 0
    %1512 = vmatmul.mubr.bf16.gmra.mrb[0].mxu0 %v1477
    %v1513 = vpop.f32.mrb[0].mxu0
    %v1514 = vadd.f32 0.0, %v1513
    %v1515 = vpop.f32.mrb[0].mxu0
    %v1516 = vpop.f32.mrb[0].mxu0
    %v1517 = vpop.f32.mrb[0].mxu0
    %1518 = vdwg.mxu0
    %v1519 = vadd.f32 %v1471, %v1514
    %v1520 = vxor.u32 %v1519, 2147483648
    %v1521 = vmul.f32 %v1520, 1.442695
    %v1522 = vpow.pop %v1521
    %v1523 = vadd.f32 %v1522, 1.0
    %v1524 = vrcp.pop %v1523
    %v1525 = vmul.f32 1.0, %v1524
    %v1526 = vtanh.pop %v1519
    %v1527 = vmul.f32 %v1525, %v1265
    %1529 = vrot.lane.b32.xlu0 %v1526, 64
    %v1530 = vpop.permute.xlu0 %1529
    %v1532 = vmul.f32 %v1525, %v1530
    %1534 = vrot.lane.b32.xlu0 %v1532, 32
    %v1535 = vpop.permute.xlu0 %1534
    %v1537 = vadd.f32 %v1527, %v1535
    %v1538 = vtanh.pop %v1537
    %1540 = vrot.lane.b32.xlu0 %v1538, 64
    %v1541 = vpop.permute.xlu0 %1540
    %v1543 = vmul.f32 %v1525, %v1541
    %1545 = vrot.lane.b32.xlu0 %v1543, 32
    %v1546 = vpop.permute.xlu0 %1545
    %1549 = vrot.lane.b32.xlu0 %v1348, 64
    %v1550 = vpop.permute.xlu0 %1549
    %v1552 = vsel %vm76, %v1546, %v1550
    %v1553 = vpack.c.bf16 %v1552, %v1552
    %v1555 = vsel %vm178, %v1553, 0
    %1557 = vmatprep.subr.bf16.mxu0 0
    %1558 = vmatpush1.bf16.msra.mxu0 %v167
    %1559 = vmatprep.subr.bf16.mxu0 0
    %1560 = vmatpush1.bf16.msra.mxu0 %v168
    %1561 = vmatprep.subr.bf16.mxu0 0
    %1562 = vmatpush1.bf16.msra.mxu0 %v169
    %1563 = vmatprep.subr.bf16.mxu0 0
    %1564 = vmatpush1.bf16.msra.mxu0 %v170
    %1565 = vmatprep.subr.bf16.mxu0 0
    %1566 = vmatpush1.bf16.msra.mxu0 0
    %1567 = vmatprep.subr.bf16.mxu0 0
    %1568 = vmatpush1.bf16.msra.mxu0 0
    %1569 = vmatprep.subr.bf16.mxu0 0
    %1570 = vmatpush1.bf16.msra.mxu0 0
    %1571 = vmatprep.subr.bf16.mxu0 0
    %1572 = vmatpush1.bf16.msra.mxu0 0
    %1573 = vmatprep.subr.bf16.mxu0 0
    %1574 = vmatpush1.bf16.msra.mxu0 0
    %1575 = vmatprep.subr.bf16.mxu0 0
    %1576 = vmatpush1.bf16.msra.mxu0 0
    %1577 = vmatprep.subr.bf16.mxu0 0
    %1578 = vmatpush1.bf16.msra.mxu0 0
    %1579 = vmatprep.subr.bf16.mxu0 0
    %1580 = vmatpush1.bf16.msra.mxu0 0
    %1581 = vmatprep.subr.bf16.mxu0 0
    %1582 = vmatpush1.bf16.msra.mxu0 0
    %1583 = vmatprep.subr.bf16.mxu0 0
    %1584 = vmatpush1.bf16.msra.mxu0 0
    %1585 = vmatprep.subr.bf16.mxu0 0
    %1586 = vmatpush1.bf16.msra.mxu0 0
    %1587 = vmatprep.subr.bf16.mxu0 0
    %1588 = vmatpush1.bf16.msra.mxu0 0
    %1589 = vmatprep.mubr.bf16.mxu0 0
    %1590 = vmatmul.mubr.bf16.gmra.mrb[0].mxu0 %v1555
    %v1591 = vpop.f32.mrb[0].mxu0
    %v1592 = vadd.f32 %v176, %v1591
    %v1593 = vpop.f32.mrb[0].mxu0
    %v1594 = vpop.f32.mrb[0].mxu0
    %v1595 = vpop.f32.mrb[0].mxu0
    %1596 = vdwg.mxu0
    %v1597 = vxor.u32 %v1592, 2147483648
    %v1598 = vmul.f32 %v1597, 1.442695
    %v1599 = vpow.pop %v1598
    %v1600 = vadd.f32 %v1599, 1.0
    %v1601 = vrcp.pop %v1600
    %v1602 = vmul.f32 1.0, %v1601
    %v1603 = vtanh.pop %v1592
    %v1604 = vmul.f32 %v1602, %v1342
    %1606 = vrot.lane.b32.xlu0 %v1603, 64
    %v1607 = vpop.permute.xlu0 %1606
    %v1609 = vmul.f32 %v1602, %v1607
    %1611 = vrot.lane.b32.xlu0 %v1609, 32
    %v1612 = vpop.permute.xlu0 %1611
    %v1614 = vadd.f32 %v1604, %v1612
    %v1615 = vtanh.pop %v1614
    %1617 = vrot.lane.b32.xlu0 %v1615, 64
    %v1618 = vpop.permute.xlu0 %1617
    %v1620 = vmul.f32 %v1602, %v1618
    %v1621 = vpack.c.bf16 %v1620, %v1620
    %1623 = vrot.lane.b32.xlu0 %v1621, 32
    %v1624 = vpop.permute.xlu0 %1623
    %v1626 = vsel %vm76, %v1624, 0
    %1628 = vmatprep.subr.bf16.mxu0 0
    %1629 = vmatpush1.bf16.msra.mxu0 %v258
    %1630 = vmatprep.subr.bf16.mxu0 0
    %1631 = vmatpush1.bf16.msra.mxu0 %v259
    %1632 = vmatprep.subr.bf16.mxu0 0
    %1633 = vmatpush1.bf16.msra.mxu0 0
    %1634 = vmatprep.subr.bf16.mxu0 0
    %1635 = vmatpush1.bf16.msra.mxu0 0
    %1636 = vmatprep.subr.bf16.mxu0 0
    %1637 = vmatpush1.bf16.msra.mxu0 0
    %1638 = vmatprep.subr.bf16.mxu0 0
    %1639 = vmatpush1.bf16.msra.mxu0 0
    %1640 = vmatprep.subr.bf16.mxu0 0
    %1641 = vmatpush1.bf16.msra.mxu0 0
    %1642 = vmatprep.subr.bf16.mxu0 0
    %1643 = vmatpush1.bf16.msra.mxu0 0
    %1644 = vmatprep.subr.bf16.mxu0 0
    %1645 = vmatpush1.bf16.msra.mxu0 0
    %1646 = vmatprep.subr.bf16.mxu0 0
    %1647 = vmatpush1.bf16.msra.mxu0 0
    %1648 = vmatprep.subr.bf16.mxu0 0
    %1649 = vmatpush1.bf16.msra.mxu0 0
    %1650 = vmatprep.subr.bf16.mxu0 0
    %1651 = vmatpush1.bf16.msra.mxu0 0
    %1652 = vmatprep.subr.bf16.mxu0 0
    %1653 = vmatpush1.bf16.msra.mxu0 0
    %1654 = vmatprep.subr.bf16.mxu0 0
    %1655 = vmatpush1.bf16.msra.mxu0 0
    %1656 = vmatprep.subr.bf16.mxu0 0
    %1657 = vmatpush1.bf16.msra.mxu0 0
    %1658 = vmatprep.subr.bf16.mxu0 0
    %1659 = vmatpush1.bf16.msra.mxu0 0
    %1660 = vmatprep.mubr.bf16.mxu0 0
    %1661 = vmatmul.mubr.bf16.gmra.mrb[0].mxu0 %v1626
    %v1662 = vpop.f32.mrb[0].mxu0
    %v1663 = vadd.f32 %v262, %v1662
    %v1664 = vpop.f32.mrb[0].mxu0
    %v1665 = vpop.f32.mrb[0].mxu0
    %v1666 = vpop.f32.mrb[0].mxu0
    %1667 = vdwg.mxu0
    %v1668 = vmul.f32 %v1663, 0.2
    %v1669 = vtanh.pop %v1668
    %v1670 = vmul.f32 %v1669, 2.5
    %v1671 = vsel %vm61, %v1670, -1e+30
    %v1672 = vsel %vm311, %v1671, -inf
    %1673 = vmax.xlane.f32.xlu0 %v1672
    %v1674 = vpop.xlane.xlu0 %1673
    %v1675 = vsub.f32 %v1671, %v1674
    %v1676 = vmul.f32 %v1675, 1.442695
    %v1677 = vpow.pop %v1676
    %v1678 = vsel %vm311, %v1677, 0.0
    %1679 = vadd.xlane.f32.xlu0 %v1678
    %v1680 = vpop.xlane.xlu0 %1679
    %v1681 = vlog2.pop %v1680
    %v1682 = vmul.f32 %v1681, 0.6931472
    %v1683 = vsub.f32 %v1675, %v1682
    %v1684 = vrcp.pop %v1680
    %v1685 = vmul.f32 %v1677, %v1684
    %v1686 = vmul.f32 %v1685, %v1683
    %v1687 = vsel %vm61, %v1686, 0.0
    %v1688 = vsel %vm311, %v1687, 0.0
    %1689 = vadd.xlane.f32.xlu0 %v1688
    %v1690 = vpop.xlane.xlu0 %1689
    %v1691 = vsub.f32 %v1419, %v1690
    %v1692 = vrot.slane %v58, 5
    %v1694 = vadd.f32 %v1671, %v1692
    %v1695 = vsel %vm311, %v1694, -inf
    %1696 = vmax.xlane.f32.xlu0 %v1695
    %v1697 = vpop.xlane.xlu0 %1696
    %vm1698 = vcmp.ge.f32.partialorder %v1694, %v1697
    %v1699 = vsel %vm1698, %v60, 128
    %v1700 = vsel %vm311, %v1699, 2147483647
    %v1701 = vand.u32 %v1700, 65535
    %v1702 = vshra.s32 %v1700, 16
    %v1703 = vcvt.s32.f32 %v1701
    %v1704 = vcvt.s32.f32 %v1702
    %1705 = vmin.xlane.f32.xlu0 %v1704
    %v1706 = vpop.xlane.xlu0 %1705
    %vm1707 = vcmp.eq.f32.partialorder %v1704, %v1706
    %v1708 = vsel %vm1707, %v1703, inf
    %1709 = vmin.xlane.f32.xlu0 %v1708
    %v1710 = vpop.xlane.xlu0 %1709
    %v1711 = vcvt.f32.s32 %v1710
    %v1712 = vcvt.f32.s32 %v1706
    %v1713 = vshll.u32 %v1712, 16
    %v1714 = vadd.s32 %v1713, %v1711
    %vm1715 = vcmp.eq.s32.totalorder %v60, %v1714
    %v1716 = vsel %vm1715, 1, 0
    %v1717 = vcvt.s32.f32 %v1716
    %v1718 = vmul.f32 %v1717, %v1683
    %v1719 = vsel %vm311, %v1718, 0.0
    %1720 = vadd.xlane.f32.xlu0 %v1719
    %v1721 = vpop.xlane.xlu0 %1720
    %v1722 = vadd.f32 %v1450, %v1721
    %v1723 = vcvt.s32.f32 %v1714
    %vm1724 = vcmp.eq.s32.totalorder %v60, 7
    %v1725 = vsel %vm1724, 1, 0
    %v1726 = vcvt.s32.f32 %v1725
    %v1727 = vmul.f32 %v1723, %v1726
    %v1728 = vadd.f32 %v1456, %v1727
    %vm1729 = vcmp.eq.s32.totalorder %v60, 0
    %v1730 = vsel %vm1729, 1, 0
    %v1731 = vcvt.s32.f32 %v1730
    %v1732 = vmul.f32 %v1722, %v1731
    %v1733 = vadd.f32 %v1728, %v1732
    %vm1734 = vcmp.eq.s32.totalorder %v60, 1
    %v1735 = vsel %vm1734, 1, 0
    %v1736 = vcvt.s32.f32 %v1735
    %v1737 = vmul.f32 %v1691, %v1736
    %v1738 = vadd.f32 %v1733, %v1737
    %1739 = vst [vmem:[%s2] sm:$0x1] %v1738
    // Predicated region
    $region18: #{controller_forward.1} parent=1 // pred_check
      _
    $region19: #{controller_forward.1} parent=1 // pred_check_branch
      %1741 = sbr.rel (0) target = $region21
    $region20: #{controller_forward.1} parent=1 // pred_region
      _
    $region21: #{controller_forward.1} parent=1 // pred_fallthru
      _
    // Predicated region
    $region22: #{controller_forward.1} parent=1 // pred_check
      _
    $region23: #{controller_forward.1} parent=1 // pred_check_branch
      %1743 = sbr.rel (0) target = $region25
    $region24: #{controller_forward.1} parent=1 // pred_region
      _
    $region25: #{controller_forward.1} parent=1 // pred_fallthru
      _
    %1744 = vsyncpa [#allocation3], 1
    %1745 = vsyncpa [#allocation5], 1

</llo_original>
